<compile_context>
chip_gen: v7x
topology: tpu7x:2x2x1
jax: 0.10.0
libtpu: 0.0.40
codegen_flags: <defaults>
</compile_context>

<pallas_src>
import jax
import jax.numpy as jnp
import numpy as np
from jax.experimental import pallas as pl
from jax.experimental.pallas import tpu as pltpu


def paper_model_kernel(x_ref,
                       w_e1_ref, b_e1_ref, w_e2_ref, b_e2_ref,
                       w_ih_ref, w_hh_ref, b_g_ref,
                       w_att_ref,
                       w_fc_ref, b_fc_ref, w_fc2_ref, b_fc2_ref,
                       out_ref,
                       hs_ref):
    _, S, D = x_ref.shape
    H = w_hh_ref.shape[0]

    x = x_ref[0]                                                    # (S, D)

    # ---- embedd: Linear -> LeakyReLU(0.01) -> Linear ----
    e1 = jnp.dot(x, w_e1_ref[...], preferred_element_type=jnp.float32) + b_e1_ref[...]
    e1 = jnp.where(e1 >= 0.0, e1, 0.01 * e1)
    emb = jnp.dot(e1, w_e2_ref[...], preferred_element_type=jnp.float32) + b_e2_ref[...]  # (S, H)

    # ---- LSTM input projection hoisted out of the recurrence ----
    x_proj = (jnp.dot(emb, w_ih_ref[...], preferred_element_type=jnp.float32)
              + b_g_ref[...])                                       # (S, 4H)

    w_hh = w_hh_ref[...]                                            # (H, 4H), hoisted
    h = jnp.zeros((1, H), jnp.float32)
    c = jnp.zeros((1, H), jnp.float32)

    # ---- statically unrolled recurrence; h/c live in vregs ----
    for t in range(S):
        gates = x_proj[t:t + 1, :] + jnp.dot(h, w_hh,
                                             preferred_element_type=jnp.float32)  # (1, 4H)
        # host reordered gate columns to [i, f, o, g]
        sg = jax.nn.sigmoid(gates[:, :3 * H])
        g = jnp.tanh(gates[:, 3 * H:])
        i = sg[:, 0:H]
        f = sg[:, H:2 * H]
        o = sg[:, 2 * H:3 * H]
        c = f * c + i * g
        h = o * jnp.tanh(c)
        hs_ref[t:t + 1, :] = h                                      # keep h_t for attention

    # ---- attention over the sequence of hidden states ----
    hs = hs_ref[...]                                                # (S, H)
    et = jnp.tanh(jnp.dot(hs, w_att_ref[...],
                          preferred_element_type=jnp.float32))      # (S, 1)
    m = jnp.max(et, axis=0, keepdims=True)
    p = jnp.exp(et - m)
    alphat = p * pl.reciprocal(jnp.sum(p, axis=0, keepdims=True))   # softmax over seq
    att = jnp.sum(alphat * hs, axis=0, keepdims=True)               # (1, H)

    # ---- dropout (identity) -> fc -> relu -> fc2 ----
    fc = jnp.dot(att, w_fc_ref[...], preferred_element_type=jnp.float32) + b_fc_ref[...]
    fc = jnp.maximum(fc, 0.0)
    out = jnp.dot(fc, w_fc2_ref[...], preferred_element_type=jnp.float32) + b_fc2_ref[...]
    out_ref[0] = out                                                # (1, O)


def paper_model_forward(x, params):
    """x: (B, S, D) float32, batch_first layout."""
    B, S, D = x.shape
    H = params["w_hh"].shape[1]          # torch w_hh is (4H, H)
    O = params["w_fc2"].shape[0]

    def reorder_gates(w):                # rows [i,f,g,o] -> [i,f,o,g]
        i, f, g, o = jnp.split(w, 4, axis=0)
        return jnp.concatenate([i, f, o, g], axis=0)

    w_e1 = params["w_e1"].T                                          # (D, H)
    b_e1 = params["b_e1"].reshape(1, H)
    w_e2 = params["w_e2"].T                                          # (H, H)
    b_e2 = params["b_e2"].reshape(1, H)
    w_ih = reorder_gates(params["w_ih"]).T                           # (H, 4H), cols [i,f,o,g]
    w_hh = reorder_gates(params["w_hh"]).T                           # (H, 4H)
    b_g = reorder_gates((params["b_ih"] + params["b_hh"]).reshape(4, H)).reshape(1, 4 * H)
    w_att = params["w_att"].T                                        # (H, 1)
    w_fc = params["w_fc"].T                                          # (H, H)
    b_fc = params["b_fc"].reshape(1, H)
    w_fc2 = params["w_fc2"].T                                        # (H, O)
    b_fc2 = params["b_fc2"].reshape(1, O)

    weights = [w_e1, b_e1, w_e2, b_e2, w_ih, w_hh, b_g,
               w_att, w_fc, b_fc, w_fc2, b_fc2]
    w_specs = [pl.BlockSpec(tuple(int(d) for d in w.shape), lambda b: (0, 0))
               for w in weights]

    # rough advisory cost estimate (tiny kernel)
    flops = int(B * (2 * S * D * H + 2 * S * H * H + 4 * S * H * 4 * H
                     + 12 * S * H + 2 * H * H + 2 * H * O))
    transcendentals = int(B * (5 * H * S + 2 * S + 1))
    bytes_accessed = int(4 * (x.size + B * O + sum(int(w.size) for w in weights)))

    out = pl.pallas_call(
        paper_model_kernel,
        out_shape=jax.ShapeDtypeStruct((B, 1, O), jnp.float32),
        grid=(B,),
        in_specs=[pl.BlockSpec((1, S, D), lambda b: (b, 0, 0))] + w_specs,
        out_specs=pl.BlockSpec((1, 1, O), lambda b: (b, 0, 0)),
        scratch_shapes=[pltpu.VMEM((S, H), jnp.float32)],            # hidden-state history
        compiler_params=pltpu.CompilerParams(
            dimension_semantics=("parallel",)),
        cost_estimate=pl.CostEstimate(flops=flops,
                                      transcendentals=transcendentals,
                                      bytes_accessed=bytes_accessed),
    )(x, *weights)
    return out.reshape(B, O)


def paper_model_reference(x, params):
    """Pure-JAX reference matching the PyTorch forward (eval dropout, no base_val)."""
    B, S, D = x.shape
    H = params["w_hh"].shape[1]

    def one(xb):
        e1 = xb @ params["w_e1"].T + params["b_e1"]
        e1 = jnp.where(e1 >= 0.0, e1, 0.01 * e1)
        emb = e1 @ params["w_e2"].T + params["b_e2"]                 # (S, H)
        w_ih, w_hh = params["w_ih"], params["w_hh"]
        b = params["b_ih"] + params["b_hh"]
        h = jnp.zeros((H,), jnp.float32)
        c = jnp.zeros((H,), jnp.float32)
        hs = []
        for t in range(S):
            gates = w_ih @ emb[t] + w_hh @ h + b
            i = jax.nn.sigmoid(gates[0:H])
            f = jax.nn.sigmoid(gates[H:2 * H])
            g = jnp.tanh(gates[2 * H:3 * H])
            o = jax.nn.sigmoid(gates[3 * H:4 * H])
            c = f * c + i * g
            h = o * jnp.tanh(c)
            hs.append(h)
        hs = jnp.stack(hs)                                           # (S, H)
        et = jnp.tanh(hs @ params["w_att"].T)[:, 0]
        alphat = jax.nn.softmax(et)
        att = alphat @ hs
        fc = att @ params["w_fc"].T + params["b_fc"]
        fc = jnp.maximum(fc, 0.0)
        return fc @ params["w_fc2"].T + params["b_fc2"]
    return jnp.stack([one(x[b]) for b in range(B)])                  # (B, O)


if __name__ == "__main__":
    # Module config: input_dim=4, seq_length=8, hidden_dim=32, layer_dim=1,
    # output_dim=1, dropout_prob=0.0, batch=2
    B, D, S, H, O = 2, 4, 8, 32, 1
    key = jax.random.PRNGKey(0)
    keys = jax.random.split(key, 16)
    kH = 1.0 / np.sqrt(H)
    kD = 1.0 / np.sqrt(D)
    params = {
        "w_e1": jax.random.uniform(keys[0], (H, D), jnp.float32, -kD, kD),
        "b_e1": jax.random.uniform(keys[1], (H,), jnp.float32, -kD, kD),
        "w_e2": jax.random.uniform(keys[2], (H, H), jnp.float32, -kH, kH),
        "b_e2": jax.random.uniform(keys[3], (H,), jnp.float32, -kH, kH),
        "w_ih": jax.random.uniform(keys[4], (4 * H, H), jnp.float32, -kH, kH),
        "w_hh": jax.random.uniform(keys[5], (4 * H, H), jnp.float32, -kH, kH),
        "b_ih": jax.random.uniform(keys[6], (4 * H,), jnp.float32, -kH, kH),
        "b_hh": jax.random.uniform(keys[7], (4 * H,), jnp.float32, -kH, kH),
        "w_att": jax.random.uniform(keys[8], (1, H), jnp.float32, -kH, kH),
        "w_fc": jax.random.uniform(keys[9], (H, H), jnp.float32, -kH, kH),
        "b_fc": jax.random.uniform(keys[10], (H,), jnp.float32, -kH, kH),
        "w_fc2": jax.random.uniform(keys[11], (O, H), jnp.float32, -kH, kH),
        "b_fc2": jax.random.uniform(keys[12], (O,), jnp.float32, -kH, kH),
    }
    x = jax.random.normal(keys[13], (B, S, D), jnp.float32)

    out = jax.block_until_ready(paper_model_forward(x, params))
    ref = jax.block_until_ready(paper_model_reference(x, params))
    np.testing.assert_allclose(np.asarray(out), np.asarray(ref), rtol=1e-4, atol=1e-4)
    print("KERNEL_OK")
</pallas_src>

<mosaic_0001>
module attributes {stable_mosaic.version = 11 : i64} {
  func.func @paper_model_kernel(%arg0: i32, %arg1: memref<1x8x4xf32, #tpu.memory_space<vmem>>, %arg2: memref<4x32xf32, #tpu.memory_space<vmem>>, %arg3: memref<1x32xf32, #tpu.memory_space<vmem>>, %arg4: memref<32x32xf32, #tpu.memory_space<vmem>>, %arg5: memref<1x32xf32, #tpu.memory_space<vmem>>, %arg6: memref<32x128xf32, #tpu.memory_space<vmem>>, %arg7: memref<32x128xf32, #tpu.memory_space<vmem>>, %arg8: memref<1x128xf32, #tpu.memory_space<vmem>>, %arg9: memref<32x1xf32, #tpu.memory_space<vmem>>, %arg10: memref<32x32xf32, #tpu.memory_space<vmem>>, %arg11: memref<1x32xf32, #tpu.memory_space<vmem>>, %arg12: memref<32x1xf32, #tpu.memory_space<vmem>>, %arg13: memref<1x1xf32, #tpu.memory_space<vmem>>, %arg14: memref<1x1x1xf32, #tpu.memory_space<vmem>>, %arg15: memref<8x32xf32, #tpu.memory_space<vmem>>) attributes {dimension_semantics = [#tpu.dimension_semantics<parallel>], iteration_bounds = array<i64: 2>, scalar_prefetch = 0 : i64, scratch_operands = 1 : i64, tpu.core_type = #tpu.core_type<tc>, window_params = [{transform_indices = @transform_0, window_bounds = array<i64: 1, 8, 4>}, {pipeline_mode = #tpu.pipeline_mode<synchronous>, transform_indices = @transform_1, window_bounds = array<i64: 4, 32>}, {pipeline_mode = #tpu.pipeline_mode<synchronous>, transform_indices = @transform_2, window_bounds = array<i64: 1, 32>}, {pipeline_mode = #tpu.pipeline_mode<synchronous>, transform_indices = @transform_3, window_bounds = array<i64: 32, 32>}, {pipeline_mode = #tpu.pipeline_mode<synchronous>, transform_indices = @transform_4, window_bounds = array<i64: 1, 32>}, {pipeline_mode = #tpu.pipeline_mode<synchronous>, transform_indices = @transform_5, window_bounds = array<i64: 32, 128>}, {pipeline_mode = #tpu.pipeline_mode<synchronous>, transform_indices = @transform_6, window_bounds = array<i64: 32, 128>}, {pipeline_mode = #tpu.pipeline_mode<synchronous>, transform_indices = @transform_7, window_bounds = array<i64: 1, 128>}, {pipeline_mode = #tpu.pipeline_mode<synchronous>, transform_indices = @transform_8, window_bounds = array<i64: 32, 1>}, {pipeline_mode = #tpu.pipeline_mode<synchronous>, transform_indices = @transform_9, window_bounds = array<i64: 32, 32>}, {pipeline_mode = #tpu.pipeline_mode<synchronous>, transform_indices = @transform_10, window_bounds = array<i64: 1, 32>}, {pipeline_mode = #tpu.pipeline_mode<synchronous>, transform_indices = @transform_11, window_bounds = array<i64: 32, 1>}, {pipeline_mode = #tpu.pipeline_mode<synchronous>, transform_indices = @transform_12, window_bounds = array<i64: 1, 1>}, {transform_indices = @transform_13, window_bounds = array<i64: 1, 1, 1>}]} {
    %c0 = arith.constant 0 : index
    %c0_0 = arith.constant 0 : index
    %c0_1 = arith.constant 0 : index
    %0 = vector.load %arg1[%c0, %c0_0, %c0_1] : memref<1x8x4xf32, #tpu.memory_space<vmem>>, vector<1x8x4xf32>
    %1 = vector.shape_cast %0 : vector<1x8x4xf32> to vector<8x4xf32>
    %c0_2 = arith.constant 0 : index
    %c0_3 = arith.constant 0 : index
    %2 = vector.load %arg2[%c0_2, %c0_3] : memref<4x32xf32, #tpu.memory_space<vmem>>, vector<4x32xf32>
    %cst = arith.constant dense<0.000000e+00> : vector<8x32xf32>
    %3 = tpu.matmul %1, %2, %cst {dimension_numbers = #tpu.dot_dimension_numbers<[1], [0], [0], [1], [0, 0, 1, 1], [], []>} : vector<8x4xf32>, vector<4x32xf32>, vector<8x32xf32> -> vector<8x32xf32>
    %c0_4 = arith.constant 0 : index
    %c0_5 = arith.constant 0 : index
    %4 = vector.load %arg3[%c0_4, %c0_5] : memref<1x32xf32, #tpu.memory_space<vmem>>, vector<1x32xf32>
    %5 = vector.broadcast %4 : vector<1x32xf32> to vector<8x32xf32>
    %6 = arith.addf %3, %5 : vector<8x32xf32>
    %cst_6 = arith.constant 0.000000e+00 : f32
    %7 = vector.broadcast %cst_6 : f32 to vector<8x32xf32>
    %8 = arith.cmpf oge, %6, %7 : vector<8x32xf32>
    %cst_7 = arith.constant 0.00999999977 : f32
    %9 = vector.broadcast %cst_7 : f32 to vector<8x32xf32>
    %10 = arith.mulf %9, %6 : vector<8x32xf32>
    %11 = arith.select %8, %6, %10 : vector<8x32xi1>, vector<8x32xf32>
    %c0_8 = arith.constant 0 : index
    %c0_9 = arith.constant 0 : index
    %12 = vector.load %arg4[%c0_8, %c0_9] : memref<32x32xf32, #tpu.memory_space<vmem>>, vector<32x32xf32>
    %cst_10 = arith.constant dense<0.000000e+00> : vector<8x32xf32>
    %13 = tpu.matmul %11, %12, %cst_10 {dimension_numbers = #tpu.dot_dimension_numbers<[1], [0], [0], [1], [0, 0, 1, 1], [], []>} : vector<8x32xf32>, vector<32x32xf32>, vector<8x32xf32> -> vector<8x32xf32>
    %c0_11 = arith.constant 0 : index
    %c0_12 = arith.constant 0 : index
    %14 = vector.load %arg5[%c0_11, %c0_12] : memref<1x32xf32, #tpu.memory_space<vmem>>, vector<1x32xf32>
    %15 = vector.broadcast %14 : vector<1x32xf32> to vector<8x32xf32>
    %16 = arith.addf %13, %15 : vector<8x32xf32>
    %c0_13 = arith.constant 0 : index
    %c0_14 = arith.constant 0 : index
    %17 = vector.load %arg6[%c0_13, %c0_14] : memref<32x128xf32, #tpu.memory_space<vmem>>, vector<32x128xf32>
    %cst_15 = arith.constant dense<0.000000e+00> : vector<8x128xf32>
    %18 = tpu.matmul %16, %17, %cst_15 {dimension_numbers = #tpu.dot_dimension_numbers<[1], [0], [0], [1], [0, 0, 1, 1], [], []>} : vector<8x32xf32>, vector<32x128xf32>, vector<8x128xf32> -> vector<8x128xf32>
    %c0_16 = arith.constant 0 : index
    %c0_17 = arith.constant 0 : index
    %19 = vector.load %arg8[%c0_16, %c0_17] : memref<1x128xf32, #tpu.memory_space<vmem>>, vector<1x128xf32>
    %20 = vector.broadcast %19 : vector<1x128xf32> to vector<8x128xf32>
    %21 = arith.addf %18, %20 : vector<8x128xf32>
    %c0_18 = arith.constant 0 : index
    %c0_19 = arith.constant 0 : index
    %22 = vector.load %arg7[%c0_18, %c0_19] : memref<32x128xf32, #tpu.memory_space<vmem>>, vector<32x128xf32>
    %cst_20 = arith.constant 0.000000e+00 : f32
    %23 = vector.broadcast %cst_20 : f32 to vector<1x32xf32>
    %cst_21 = arith.constant 0.000000e+00 : f32
    %24 = vector.broadcast %cst_21 : f32 to vector<1x32xf32>
    %25 = vector.extract_strided_slice %21 {offsets = [0, 0], sizes = [1, 128], strides = [1, 1]} : vector<8x128xf32> to vector<1x128xf32>
    %cst_22 = arith.constant dense<0.000000e+00> : vector<1x128xf32>
    %26 = tpu.matmul %23, %22, %cst_22 {dimension_numbers = #tpu.dot_dimension_numbers<[1], [0], [0], [1], [0, 0, 1, 1], [], []>} : vector<1x32xf32>, vector<32x128xf32>, vector<1x128xf32> -> vector<1x128xf32>
    %27 = arith.addf %25, %26 : vector<1x128xf32>
    %28 = vector.extract_strided_slice %27 {offsets = [0, 0], sizes = [1, 96], strides = [1, 1]} : vector<1x128xf32> to vector<1x96xf32>
    %29 = arith.negf %28 : vector<1x96xf32>
    %30 = math.exp %29 : vector<1x96xf32>
    %cst_23 = arith.constant 1.000000e+00 : f32
    %31 = vector.broadcast %cst_23 : f32 to vector<1x96xf32>
    %32 = arith.addf %31, %30 : vector<1x96xf32>
    %33 = arith.divf %31, %32 : vector<1x96xf32>
    %34 = vector.extract_strided_slice %27 {offsets = [0, 96], sizes = [1, 32], strides = [1, 1]} : vector<1x128xf32> to vector<1x32xf32>
    %35 = math.tanh %34 : vector<1x32xf32>
    %36 = vector.extract_strided_slice %33 {offsets = [0, 0], sizes = [1, 32], strides = [1, 1]} : vector<1x96xf32> to vector<1x32xf32>
    %37 = vector.extract_strided_slice %33 {offsets = [0, 32], sizes = [1, 32], strides = [1, 1]} : vector<1x96xf32> to vector<1x32xf32>
    %38 = vector.extract_strided_slice %33 {offsets = [0, 64], sizes = [1, 32], strides = [1, 1]} : vector<1x96xf32> to vector<1x32xf32>
    %39 = arith.mulf %37, %24 : vector<1x32xf32>
    %40 = arith.mulf %36, %35 : vector<1x32xf32>
    %41 = arith.addf %39, %40 : vector<1x32xf32>
    %42 = math.tanh %41 : vector<1x32xf32>
    %43 = arith.mulf %38, %42 : vector<1x32xf32>
    %c0_24 = arith.constant 0 : index
    %c0_25 = arith.constant 0 : index
    %44 = vector.load %arg15[%c0_24, %c0_25] : memref<8x32xf32, #tpu.memory_space<vmem>>, vector<1x32xf32>
    tpu.vector_store %arg15[%c0_24, %c0_25], %43 {strides = array<i32>} : memref<8x32xf32, #tpu.memory_space<vmem>>, vector<1x32xf32>,
    %45 = vector.extract_strided_slice %21 {offsets = [1, 0], sizes = [1, 128], strides = [1, 1]} : vector<8x128xf32> to vector<1x128xf32>
    %cst_26 = arith.constant dense<0.000000e+00> : vector<1x128xf32>
    %46 = tpu.matmul %43, %22, %cst_26 {dimension_numbers = #tpu.dot_dimension_numbers<[1], [0], [0], [1], [0, 0, 1, 1], [], []>} : vector<1x32xf32>, vector<32x128xf32>, vector<1x128xf32> -> vector<1x128xf32>
    %47 = arith.addf %45, %46 : vector<1x128xf32>
    %48 = vector.extract_strided_slice %47 {offsets = [0, 0], sizes = [1, 96], strides = [1, 1]} : vector<1x128xf32> to vector<1x96xf32>
    %49 = arith.negf %48 : vector<1x96xf32>
    %50 = math.exp %49 : vector<1x96xf32>
    %cst_27 = arith.constant 1.000000e+00 : f32
    %51 = vector.broadcast %cst_27 : f32 to vector<1x96xf32>
    %52 = arith.addf %51, %50 : vector<1x96xf32>
    %53 = arith.divf %51, %52 : vector<1x96xf32>
    %54 = vector.extract_strided_slice %47 {offsets = [0, 96], sizes = [1, 32], strides = [1, 1]} : vector<1x128xf32> to vector<1x32xf32>
    %55 = math.tanh %54 : vector<1x32xf32>
    %56 = vector.extract_strided_slice %53 {offsets = [0, 0], sizes = [1, 32], strides = [1, 1]} : vector<1x96xf32> to vector<1x32xf32>
    %57 = vector.extract_strided_slice %53 {offsets = [0, 32], sizes = [1, 32], strides = [1, 1]} : vector<1x96xf32> to vector<1x32xf32>
    %58 = vector.extract_strided_slice %53 {offsets = [0, 64], sizes = [1, 32], strides = [1, 1]} : vector<1x96xf32> to vector<1x32xf32>
    %59 = arith.mulf %57, %41 : vector<1x32xf32>
    %60 = arith.mulf %56, %55 : vector<1x32xf32>
    %61 = arith.addf %59, %60 : vector<1x32xf32>
    %62 = math.tanh %61 : vector<1x32xf32>
    %63 = arith.mulf %58, %62 : vector<1x32xf32>
    %c1 = arith.constant 1 : index
    %c0_28 = arith.constant 0 : index
    %64 = vector.load %arg15[%c1, %c0_28] : memref<8x32xf32, #tpu.memory_space<vmem>>, vector<1x32xf32>
    tpu.vector_store %arg15[%c1, %c0_28], %63 {strides = array<i32>} : memref<8x32xf32, #tpu.memory_space<vmem>>, vector<1x32xf32>,
    %65 = vector.extract_strided_slice %21 {offsets = [2, 0], sizes = [1, 128], strides = [1, 1]} : vector<8x128xf32> to vector<1x128xf32>
    %cst_29 = arith.constant dense<0.000000e+00> : vector<1x128xf32>
    %66 = tpu.matmul %63, %22, %cst_29 {dimension_numbers = #tpu.dot_dimension_numbers<[1], [0], [0], [1], [0, 0, 1, 1], [], []>} : vector<1x32xf32>, vector<32x128xf32>, vector<1x128xf32> -> vector<1x128xf32>
    %67 = arith.addf %65, %66 : vector<1x128xf32>
    %68 = vector.extract_strided_slice %67 {offsets = [0, 0], sizes = [1, 96], strides = [1, 1]} : vector<1x128xf32> to vector<1x96xf32>
    %69 = arith.negf %68 : vector<1x96xf32>
    %70 = math.exp %69 : vector<1x96xf32>
    %cst_30 = arith.constant 1.000000e+00 : f32
    %71 = vector.broadcast %cst_30 : f32 to vector<1x96xf32>
    %72 = arith.addf %71, %70 : vector<1x96xf32>
    %73 = arith.divf %71, %72 : vector<1x96xf32>
    %74 = vector.extract_strided_slice %67 {offsets = [0, 96], sizes = [1, 32], strides = [1, 1]} : vector<1x128xf32> to vector<1x32xf32>
    %75 = math.tanh %74 : vector<1x32xf32>
    %76 = vector.extract_strided_slice %73 {offsets = [0, 0], sizes = [1, 32], strides = [1, 1]} : vector<1x96xf32> to vector<1x32xf32>
    %77 = vector.extract_strided_slice %73 {offsets = [0, 32], sizes = [1, 32], strides = [1, 1]} : vector<1x96xf32> to vector<1x32xf32>
    %78 = vector.extract_strided_slice %73 {offsets = [0, 64], sizes = [1, 32], strides = [1, 1]} : vector<1x96xf32> to vector<1x32xf32>
    %79 = arith.mulf %77, %61 : vector<1x32xf32>
    %80 = arith.mulf %76, %75 : vector<1x32xf32>
    %81 = arith.addf %79, %80 : vector<1x32xf32>
    %82 = math.tanh %81 : vector<1x32xf32>
    %83 = arith.mulf %78, %82 : vector<1x32xf32>
    %c2 = arith.constant 2 : index
    %c0_31 = arith.constant 0 : index
    %84 = vector.load %arg15[%c2, %c0_31] : memref<8x32xf32, #tpu.memory_space<vmem>>, vector<1x32xf32>
    tpu.vector_store %arg15[%c2, %c0_31], %83 {strides = array<i32>} : memref<8x32xf32, #tpu.memory_space<vmem>>, vector<1x32xf32>,
    %85 = vector.extract_strided_slice %21 {offsets = [3, 0], sizes = [1, 128], strides = [1, 1]} : vector<8x128xf32> to vector<1x128xf32>
    %cst_32 = arith.constant dense<0.000000e+00> : vector<1x128xf32>
    %86 = tpu.matmul %83, %22, %cst_32 {dimension_numbers = #tpu.dot_dimension_numbers<[1], [0], [0], [1], [0, 0, 1, 1], [], []>} : vector<1x32xf32>, vector<32x128xf32>, vector<1x128xf32> -> vector<1x128xf32>
    %87 = arith.addf %85, %86 : vector<1x128xf32>
    %88 = vector.extract_strided_slice %87 {offsets = [0, 0], sizes = [1, 96], strides = [1, 1]} : vector<1x128xf32> to vector<1x96xf32>
    %89 = arith.negf %88 : vector<1x96xf32>
    %90 = math.exp %89 : vector<1x96xf32>
    %cst_33 = arith.constant 1.000000e+00 : f32
    %91 = vector.broadcast %cst_33 : f32 to vector<1x96xf32>
    %92 = arith.addf %91, %90 : vector<1x96xf32>
    %93 = arith.divf %91, %92 : vector<1x96xf32>
    %94 = vector.extract_strided_slice %87 {offsets = [0, 96], sizes = [1, 32], strides = [1, 1]} : vector<1x128xf32> to vector<1x32xf32>
    %95 = math.tanh %94 : vector<1x32xf32>
    %96 = vector.extract_strided_slice %93 {offsets = [0, 0], sizes = [1, 32], strides = [1, 1]} : vector<1x96xf32> to vector<1x32xf32>
    %97 = vector.extract_strided_slice %93 {offsets = [0, 32], sizes = [1, 32], strides = [1, 1]} : vector<1x96xf32> to vector<1x32xf32>
    %98 = vector.extract_strided_slice %93 {offsets = [0, 64], sizes = [1, 32], strides = [1, 1]} : vector<1x96xf32> to vector<1x32xf32>
    %99 = arith.mulf %97, %81 : vector<1x32xf32>
    %100 = arith.mulf %96, %95 : vector<1x32xf32>
    %101 = arith.addf %99, %100 : vector<1x32xf32>
    %102 = math.tanh %101 : vector<1x32xf32>
    %103 = arith.mulf %98, %102 : vector<1x32xf32>
    %c3 = arith.constant 3 : index
    %c0_34 = arith.constant 0 : index
    %104 = vector.load %arg15[%c3, %c0_34] : memref<8x32xf32, #tpu.memory_space<vmem>>, vector<1x32xf32>
    tpu.vector_store %arg15[%c3, %c0_34], %103 {strides = array<i32>} : memref<8x32xf32, #tpu.memory_space<vmem>>, vector<1x32xf32>,
    %105 = vector.extract_strided_slice %21 {offsets = [4, 0], sizes = [1, 128], strides = [1, 1]} : vector<8x128xf32> to vector<1x128xf32>
    %cst_35 = arith.constant dense<0.000000e+00> : vector<1x128xf32>
    %106 = tpu.matmul %103, %22, %cst_35 {dimension_numbers = #tpu.dot_dimension_numbers<[1], [0], [0], [1], [0, 0, 1, 1], [], []>} : vector<1x32xf32>, vector<32x128xf32>, vector<1x128xf32> -> vector<1x128xf32>
    %107 = arith.addf %105, %106 : vector<1x128xf32>
    %108 = vector.extract_strided_slice %107 {offsets = [0, 0], sizes = [1, 96], strides = [1, 1]} : vector<1x128xf32> to vector<1x96xf32>
    %109 = arith.negf %108 : vector<1x96xf32>
    %110 = math.exp %109 : vector<1x96xf32>
    %cst_36 = arith.constant 1.000000e+00 : f32
    %111 = vector.broadcast %cst_36 : f32 to vector<1x96xf32>
    %112 = arith.addf %111, %110 : vector<1x96xf32>
    %113 = arith.divf %111, %112 : vector<1x96xf32>
    %114 = vector.extract_strided_slice %107 {offsets = [0, 96], sizes = [1, 32], strides = [1, 1]} : vector<1x128xf32> to vector<1x32xf32>
    %115 = math.tanh %114 : vector<1x32xf32>
    %116 = vector.extract_strided_slice %113 {offsets = [0, 0], sizes = [1, 32], strides = [1, 1]} : vector<1x96xf32> to vector<1x32xf32>
    %117 = vector.extract_strided_slice %113 {offsets = [0, 32], sizes = [1, 32], strides = [1, 1]} : vector<1x96xf32> to vector<1x32xf32>
    %118 = vector.extract_strided_slice %113 {offsets = [0, 64], sizes = [1, 32], strides = [1, 1]} : vector<1x96xf32> to vector<1x32xf32>
    %119 = arith.mulf %117, %101 : vector<1x32xf32>
    %120 = arith.mulf %116, %115 : vector<1x32xf32>
    %121 = arith.addf %119, %120 : vector<1x32xf32>
    %122 = math.tanh %121 : vector<1x32xf32>
    %123 = arith.mulf %118, %122 : vector<1x32xf32>
    %c4 = arith.constant 4 : index
    %c0_37 = arith.constant 0 : index
    %124 = vector.load %arg15[%c4, %c0_37] : memref<8x32xf32, #tpu.memory_space<vmem>>, vector<1x32xf32>
    tpu.vector_store %arg15[%c4, %c0_37], %123 {strides = array<i32>} : memref<8x32xf32, #tpu.memory_space<vmem>>, vector<1x32xf32>,
    %125 = vector.extract_strided_slice %21 {offsets = [5, 0], sizes = [1, 128], strides = [1, 1]} : vector<8x128xf32> to vector<1x128xf32>
    %cst_38 = arith.constant dense<0.000000e+00> : vector<1x128xf32>
    %126 = tpu.matmul %123, %22, %cst_38 {dimension_numbers = #tpu.dot_dimension_numbers<[1], [0], [0], [1], [0, 0, 1, 1], [], []>} : vector<1x32xf32>, vector<32x128xf32>, vector<1x128xf32> -> vector<1x128xf32>
    %127 = arith.addf %125, %126 : vector<1x128xf32>
    %128 = vector.extract_strided_slice %127 {offsets = [0, 0], sizes = [1, 96], strides = [1, 1]} : vector<1x128xf32> to vector<1x96xf32>
    %129 = arith.negf %128 : vector<1x96xf32>
    %130 = math.exp %129 : vector<1x96xf32>
    %cst_39 = arith.constant 1.000000e+00 : f32
    %131 = vector.broadcast %cst_39 : f32 to vector<1x96xf32>
    %132 = arith.addf %131, %130 : vector<1x96xf32>
    %133 = arith.divf %131, %132 : vector<1x96xf32>
    %134 = vector.extract_strided_slice %127 {offsets = [0, 96], sizes = [1, 32], strides = [1, 1]} : vector<1x128xf32> to vector<1x32xf32>
    %135 = math.tanh %134 : vector<1x32xf32>
    %136 = vector.extract_strided_slice %133 {offsets = [0, 0], sizes = [1, 32], strides = [1, 1]} : vector<1x96xf32> to vector<1x32xf32>
    %137 = vector.extract_strided_slice %133 {offsets = [0, 32], sizes = [1, 32], strides = [1, 1]} : vector<1x96xf32> to vector<1x32xf32>
    %138 = vector.extract_strided_slice %133 {offsets = [0, 64], sizes = [1, 32], strides = [1, 1]} : vector<1x96xf32> to vector<1x32xf32>
    %139 = arith.mulf %137, %121 : vector<1x32xf32>
    %140 = arith.mulf %136, %135 : vector<1x32xf32>
    %141 = arith.addf %139, %140 : vector<1x32xf32>
    %142 = math.tanh %141 : vector<1x32xf32>
    %143 = arith.mulf %138, %142 : vector<1x32xf32>
    %c5 = arith.constant 5 : index
    %c0_40 = arith.constant 0 : index
    %144 = vector.load %arg15[%c5, %c0_40] : memref<8x32xf32, #tpu.memory_space<vmem>>, vector<1x32xf32>
    tpu.vector_store %arg15[%c5, %c0_40], %143 {strides = array<i32>} : memref<8x32xf32, #tpu.memory_space<vmem>>, vector<1x32xf32>,
    %145 = vector.extract_strided_slice %21 {offsets = [6, 0], sizes = [1, 128], strides = [1, 1]} : vector<8x128xf32> to vector<1x128xf32>
    %cst_41 = arith.constant dense<0.000000e+00> : vector<1x128xf32>
    %146 = tpu.matmul %143, %22, %cst_41 {dimension_numbers = #tpu.dot_dimension_numbers<[1], [0], [0], [1], [0, 0, 1, 1], [], []>} : vector<1x32xf32>, vector<32x128xf32>, vector<1x128xf32> -> vector<1x128xf32>
    %147 = arith.addf %145, %146 : vector<1x128xf32>
    %148 = vector.extract_strided_slice %147 {offsets = [0, 0], sizes = [1, 96], strides = [1, 1]} : vector<1x128xf32> to vector<1x96xf32>
    %149 = arith.negf %148 : vector<1x96xf32>
    %150 = math.exp %149 : vector<1x96xf32>
    %cst_42 = arith.constant 1.000000e+00 : f32
    %151 = vector.broadcast %cst_42 : f32 to vector<1x96xf32>
    %152 = arith.addf %151, %150 : vector<1x96xf32>
    %153 = arith.divf %151, %152 : vector<1x96xf32>
    %154 = vector.extract_strided_slice %147 {offsets = [0, 96], sizes = [1, 32], strides = [1, 1]} : vector<1x128xf32> to vector<1x32xf32>
    %155 = math.tanh %154 : vector<1x32xf32>
    %156 = vector.extract_strided_slice %153 {offsets = [0, 0], sizes = [1, 32], strides = [1, 1]} : vector<1x96xf32> to vector<1x32xf32>
    %157 = vector.extract_strided_slice %153 {offsets = [0, 32], sizes = [1, 32], strides = [1, 1]} : vector<1x96xf32> to vector<1x32xf32>
    %158 = vector.extract_strided_slice %153 {offsets = [0, 64], sizes = [1, 32], strides = [1, 1]} : vector<1x96xf32> to vector<1x32xf32>
    %159 = arith.mulf %157, %141 : vector<1x32xf32>
    %160 = arith.mulf %156, %155 : vector<1x32xf32>
    %161 = arith.addf %159, %160 : vector<1x32xf32>
    %162 = math.tanh %161 : vector<1x32xf32>
    %163 = arith.mulf %158, %162 : vector<1x32xf32>
    %c6 = arith.constant 6 : index
    %c0_43 = arith.constant 0 : index
    %164 = vector.load %arg15[%c6, %c0_43] : memref<8x32xf32, #tpu.memory_space<vmem>>, vector<1x32xf32>
    tpu.vector_store %arg15[%c6, %c0_43], %163 {strides = array<i32>} : memref<8x32xf32, #tpu.memory_space<vmem>>, vector<1x32xf32>,
    %165 = vector.extract_strided_slice %21 {offsets = [7, 0], sizes = [1, 128], strides = [1, 1]} : vector<8x128xf32> to vector<1x128xf32>
    %cst_44 = arith.constant dense<0.000000e+00> : vector<1x128xf32>
    %166 = tpu.matmul %163, %22, %cst_44 {dimension_numbers = #tpu.dot_dimension_numbers<[1], [0], [0], [1], [0, 0, 1, 1], [], []>} : vector<1x32xf32>, vector<32x128xf32>, vector<1x128xf32> -> vector<1x128xf32>
    %167 = arith.addf %165, %166 : vector<1x128xf32>
    %168 = vector.extract_strided_slice %167 {offsets = [0, 0], sizes = [1, 96], strides = [1, 1]} : vector<1x128xf32> to vector<1x96xf32>
    %169 = arith.negf %168 : vector<1x96xf32>
    %170 = math.exp %169 : vector<1x96xf32>
    %cst_45 = arith.constant 1.000000e+00 : f32
    %171 = vector.broadcast %cst_45 : f32 to vector<1x96xf32>
    %172 = arith.addf %171, %170 : vector<1x96xf32>
    %173 = arith.divf %171, %172 : vector<1x96xf32>
    %174 = vector.extract_strided_slice %167 {offsets = [0, 96], sizes = [1, 32], strides = [1, 1]} : vector<1x128xf32> to vector<1x32xf32>
    %175 = math.tanh %174 : vector<1x32xf32>
    %176 = vector.extract_strided_slice %173 {offsets = [0, 0], sizes = [1, 32], strides = [1, 1]} : vector<1x96xf32> to vector<1x32xf32>
    %177 = vector.extract_strided_slice %173 {offsets = [0, 32], sizes = [1, 32], strides = [1, 1]} : vector<1x96xf32> to vector<1x32xf32>
    %178 = vector.extract_strided_slice %173 {offsets = [0, 64], sizes = [1, 32], strides = [1, 1]} : vector<1x96xf32> to vector<1x32xf32>
    %179 = arith.mulf %177, %161 : vector<1x32xf32>
    %180 = arith.mulf %176, %175 : vector<1x32xf32>
    %181 = arith.addf %179, %180 : vector<1x32xf32>
    %182 = math.tanh %181 : vector<1x32xf32>
    %183 = arith.mulf %178, %182 : vector<1x32xf32>
    %c7 = arith.constant 7 : index
    %c0_46 = arith.constant 0 : index
    %184 = vector.load %arg15[%c7, %c0_46] : memref<8x32xf32, #tpu.memory_space<vmem>>, vector<1x32xf32>
    tpu.vector_store %arg15[%c7, %c0_46], %183 {strides = array<i32>} : memref<8x32xf32, #tpu.memory_space<vmem>>, vector<1x32xf32>,
    %c0_47 = arith.constant 0 : index
    %c0_48 = arith.constant 0 : index
    %185 = vector.load %arg15[%c0_47, %c0_48] : memref<8x32xf32, #tpu.memory_space<vmem>>, vector<8x32xf32>
    %c0_49 = arith.constant 0 : index
    %c0_50 = arith.constant 0 : index
    %186 = vector.load %arg9[%c0_49, %c0_50] : memref<32x1xf32, #tpu.memory_space<vmem>>, vector<32x1xf32>
    %cst_51 = arith.constant dense<0.000000e+00> : vector<8x1xf32>
    %187 = tpu.matmul %185, %186, %cst_51 {dimension_numbers = #tpu.dot_dimension_numbers<[1], [0], [0], [1], [0, 0, 1, 1], [], []>} : vector<8x32xf32>, vector<32x1xf32>, vector<8x1xf32> -> vector<8x1xf32>
    %188 = math.tanh %187 : vector<8x1xf32>
    %cst_52 = arith.constant dense<0xFF800000> : vector<1xf32>
    %189 = vector.multi_reduction <maximumf>, %188, %cst_52 [0] : vector<8x1xf32> to vector<1xf32>
    %190 = vector.shape_cast %189 : vector<1xf32> to vector<1x1xf32>
    %191 = vector.broadcast %190 : vector<1x1xf32> to vector<8x1xf32>
    %192 = arith.subf %188, %191 : vector<8x1xf32>
    %193 = math.exp %192 : vector<8x1xf32>
    %cst_53 = arith.constant dense<0.000000e+00> : vector<1xf32>
    %194 = vector.multi_reduction <add>, %193, %cst_53 [0] : vector<8x1xf32> to vector<1xf32>
    %195 = vector.shape_cast %194 : vector<1xf32> to vector<1x1xf32>
    %196 = tpu.reciprocal %195 : vector<1x1xf32> -> vector<1x1xf32>
    %197 = vector.broadcast %196 : vector<1x1xf32> to vector<8x1xf32>
    %198 = arith.mulf %193, %197 : vector<8x1xf32>
    %199 = vector.broadcast %198 : vector<8x1xf32> to vector<8x32xf32>
    %200 = arith.mulf %199, %185 : vector<8x32xf32>
    %cst_54 = arith.constant dense<0.000000e+00> : vector<32xf32>
    %201 = vector.multi_reduction <add>, %200, %cst_54 [0] : vector<8x32xf32> to vector<32xf32>
    %202 = vector.shape_cast %201 : vector<32xf32> to vector<1x32xf32>
    %c0_55 = arith.constant 0 : index
    %c0_56 = arith.constant 0 : index
    %203 = vector.load %arg10[%c0_55, %c0_56] : memref<32x32xf32, #tpu.memory_space<vmem>>, vector<32x32xf32>
    %cst_57 = arith.constant dense<0.000000e+00> : vector<1x32xf32>
    %204 = tpu.matmul %202, %203, %cst_57 {dimension_numbers = #tpu.dot_dimension_numbers<[1], [0], [0], [1], [0, 0, 1, 1], [], []>} : vector<1x32xf32>, vector<32x32xf32>, vector<1x32xf32> -> vector<1x32xf32>
    %c0_58 = arith.constant 0 : index
    %c0_59 = arith.constant 0 : index
    %205 = vector.load %arg11[%c0_58, %c0_59] : memref<1x32xf32, #tpu.memory_space<vmem>>, vector<1x32xf32>
    %206 = arith.addf %204, %205 : vector<1x32xf32>
    %cst_60 = arith.constant 0.000000e+00 : f32
    %207 = vector.broadcast %cst_60 : f32 to vector<1x32xf32>
    %208 = arith.maximumf %206, %207 : vector<1x32xf32>
    %c0_61 = arith.constant 0 : index
    %c0_62 = arith.constant 0 : index
    %209 = vector.load %arg12[%c0_61, %c0_62] : memref<32x1xf32, #tpu.memory_space<vmem>>, vector<32x1xf32>
    %cst_63 = arith.constant dense<0.000000e+00> : vector<1x1xf32>
    %210 = tpu.matmul %208, %209, %cst_63 {dimension_numbers = #tpu.dot_dimension_numbers<[1], [0], [0], [1], [0, 0, 1, 1], [], []>} : vector<1x32xf32>, vector<32x1xf32>, vector<1x1xf32> -> vector<1x1xf32>
    %c0_64 = arith.constant 0 : index
    %c0_65 = arith.constant 0 : index
    %211 = vector.load %arg13[%c0_64, %c0_65] : memref<1x1xf32, #tpu.memory_space<vmem>>, vector<1x1xf32>
    %212 = arith.addf %210, %211 : vector<1x1xf32>
    %c0_66 = arith.constant 0 : index
    %c0_67 = arith.constant 0 : index
    %c0_68 = arith.constant 0 : index
    %213 = vector.load %arg14[%c0_66, %c0_67, %c0_68] : memref<1x1x1xf32, #tpu.memory_space<vmem>>, vector<1x1x1xf32>
    %214 = vector.shape_cast %213 : vector<1x1x1xf32> to vector<1x1xf32>
    %215 = vector.shape_cast %212 : vector<1x1xf32> to vector<1x1x1xf32>
    tpu.vector_store %arg14[%c0_66, %c0_67, %c0_68], %215 {strides = array<i32>} : memref<1x1x1xf32, #tpu.memory_space<vmem>>, vector<1x1x1xf32>,
    return
  }
  func.func @transform_0(%arg0: i32) -> (i32, i32, i32) {
    %c0_i32 = arith.constant 0 : i32
    %c0_i32_0 = arith.constant 0 : i32
    %c0_i32_1 = arith.constant 0 : i32
    return %arg0, %c0_i32, %c0_i32_0 : i32, i32, i32
  }
  func.func @transform_1(%arg0: i32) -> (i32, i32) {
    %c0_i32 = arith.constant 0 : i32
    %c0_i32_0 = arith.constant 0 : i32
    %c0_i32_1 = arith.constant 0 : i32
    return %c0_i32, %c0_i32_0 : i32, i32
  }
  func.func @transform_2(%arg0: i32) -> (i32, i32) {
    %c0_i32 = arith.constant 0 : i32
    %c0_i32_0 = arith.constant 0 : i32
    %c0_i32_1 = arith.constant 0 : i32
    return %c0_i32, %c0_i32_0 : i32, i32
  }
  func.func @transform_3(%arg0: i32) -> (i32, i32) {
    %c0_i32 = arith.constant 0 : i32
    %c0_i32_0 = arith.constant 0 : i32
    %c0_i32_1 = arith.constant 0 : i32
    return %c0_i32, %c0_i32_0 : i32, i32
  }
  func.func @transform_4(%arg0: i32) -> (i32, i32) {
    %c0_i32 = arith.constant 0 : i32
    %c0_i32_0 = arith.constant 0 : i32
    %c0_i32_1 = arith.constant 0 : i32
    return %c0_i32, %c0_i32_0 : i32, i32
  }
  func.func @transform_5(%arg0: i32) -> (i32, i32) {
    %c0_i32 = arith.constant 0 : i32
    %c0_i32_0 = arith.constant 0 : i32
    %c0_i32_1 = arith.constant 0 : i32
    return %c0_i32, %c0_i32_0 : i32, i32
  }
  func.func @transform_6(%arg0: i32) -> (i32, i32) {
    %c0_i32 = arith.constant 0 : i32
    %c0_i32_0 = arith.constant 0 : i32
    %c0_i32_1 = arith.constant 0 : i32
    return %c0_i32, %c0_i32_0 : i32, i32
  }
  func.func @transform_7(%arg0: i32) -> (i32, i32) {
    %c0_i32 = arith.constant 0 : i32
    %c0_i32_0 = arith.constant 0 : i32
    %c0_i32_1 = arith.constant 0 : i32
    return %c0_i32, %c0_i32_0 : i32, i32
  }
  func.func @transform_8(%arg0: i32) -> (i32, i32) {
    %c0_i32 = arith.constant 0 : i32
    %c0_i32_0 = arith.constant 0 : i32
    %c0_i32_1 = arith.constant 0 : i32
    return %c0_i32, %c0_i32_0 : i32, i32
  }
  func.func @transform_9(%arg0: i32) -> (i32, i32) {
    %c0_i32 = arith.constant 0 : i32
    %c0_i32_0 = arith.constant 0 : i32
    %c0_i32_1 = arith.constant 0 : i32
    return %c0_i32, %c0_i32_0 : i32, i32
  }
  func.func @transform_10(%arg0: i32) -> (i32, i32) {
    %c0_i32 = arith.constant 0 : i32
    %c0_i32_0 = arith.constant 0 : i32
    %c0_i32_1 = arith.constant 0 : i32
    return %c0_i32, %c0_i32_0 : i32, i32
  }
  func.func @transform_11(%arg0: i32) -> (i32, i32) {
    %c0_i32 = arith.constant 0 : i32
    %c0_i32_0 = arith.constant 0 : i32
    %c0_i32_1 = arith.constant 0 : i32
    return %c0_i32, %c0_i32_0 : i32, i32
  }
  func.func @transform_12(%arg0: i32) -> (i32, i32) {
    %c0_i32 = arith.constant 0 : i32
    %c0_i32_0 = arith.constant 0 : i32
    %c0_i32_1 = arith.constant 0 : i32
    return %c0_i32, %c0_i32_0 : i32, i32
  }
  func.func @transform_13(%arg0: i32) -> (i32, i32, i32) {
    %c0_i32 = arith.constant 0 : i32
    %c0_i32_0 = arith.constant 0 : i32
    %c0_i32_1 = arith.constant 0 : i32
    return %arg0, %c0_i32, %c0_i32_0 : i32, i32, i32
  }
}

</mosaic_0001>

<llo_original>
// kernel: tpu_custom_call.1
$region0: #{tpu_custom_call.1}
  #allocation0 [shape = 'u32[]', space=smem, size = 0x4, offset = 0x4, fixed_abs, tag = 'smem constant byte address 0x4 - core index']
  #allocation1 [shape = 'u32[144,128]{1,0:T(1,128)}', space=vmem, size = 0x12000, scoped, tag = 'internal scratch']
  #allocation2 [shape = 'f32[8,32]{1,0:T(8,128)}', space=vmem, size = 0x1000, scoped, tag = 'scratch operand']
  #allocation3 [shape = 'f32[1,1]{1,0:T(1,128)S(1)}', space=vmem, size = 0x200, scoped, tag = 'scoped memory for tpu_custom_call.1']
  %s0 = inlined_call_operand.vmem [shape: f32[2,8,4], index: 0, kind: input, shape index: {}]
  %s1 = inlined_call_operand.hbm [shape: f32[4,32], index: 1, kind: input, shape index: {}]
  %s2 = inlined_call_operand.vmem [shape: f32[1,32], index: 2, kind: input, shape index: {}]
  %s3 = inlined_call_operand.vmem [shape: f32[32,32], index: 3, kind: input, shape index: {}]
  %s4 = inlined_call_operand.vmem [shape: f32[1,32], index: 4, kind: input, shape index: {}]
  %s5 = inlined_call_operand.vmem [shape: f32[32,128], index: 5, kind: input, shape index: {}]
  %s6 = inlined_call_operand.vmem [shape: f32[32,128], index: 6, kind: input, shape index: {}]
  %s7 = inlined_call_operand.vmem [shape: f32[1,128], index: 7, kind: input, shape index: {}]
  %s8 = inlined_call_operand.vmem [shape: f32[32,1], index: 8, kind: input, shape index: {}]
  %s9 = inlined_call_operand.hbm [shape: f32[32,32], index: 9, kind: input, shape index: {}]
  %s10 = inlined_call_operand.vmem [shape: f32[1,32], index: 10, kind: input, shape index: {}]
  %s11 = inlined_call_operand.vmem [shape: f32[32,1], index: 11, kind: input, shape index: {}]
  %s12 = inlined_call_operand.<no memory space> [shape: f32[1,1], index: 12, kind: input, shape index: {}]
  %s13 = inlined_call_operand.vmem [shape: f32[2,1,1], index: 13, kind: output, shape index: {}]
  %s14 = sld [smem:[#allocation0]]
  $region93: #{tpu_custom_call.1} parent=0
    _
  %s16 = ssub.s32 1, %s14
  %s17 = scalar_select 0, %s16, %s14
  %v18 = vstv %s12
  %19 = vst [vmem:[#allocation3] sm:$0x1] %v18
  $region1: #{tpu_custom_call.1} parent=0
    #allocation4 [shape = 'u8[2048]{0}', space=vmem, size = 0x800, scoped, tag = 'input window, operand 1, single buffered']
    #allocation5 [shape = 's32[2]{0}', space=sflag, size = 0x8, scoped, tag = 'scoped memory for tpu_custom_call.1']
    #allocation6 [shape = 'u8[16384]{0}', space=vmem, size = 0x4000, scoped, tag = 'input window, operand 9, single buffered']
    #allocation7 [shape = 's32[1]{0}', space=sflag, size = 0x4, scoped, tag = 'scoped memory for tpu_custom_call.1']
    %20 = vsyncpa [#allocation5], 0
    %21 = vsyncpa [#allocation7], 0
    loop: start=0, step=1, limit=4
    $region2: #{tpu_custom_call.1} parent=1 // loop_pre_header
      _
    $region3: #{tpu_custom_call.1} parent=1 // loop_header
      %s23 = sphi 0, %s27
      %p24 = scmp.ge.s32.totalorder %s23, 4
      %s33 = sphi 0, %s35
      %s36 = sphi 0, %s33
      %s37 = sphi 0, %s36
      %s53 = sphi 0, %s37
      %s57 = sphi 0, %s57
      %s59 = sphi 0, %s57
      %s60 = sphi 0, %s59
      %s74 = sphi 0, %s60
      %s78 = sphi 0, %s78
      %s80 = sphi 0, %s78
      %s81 = sphi 0, %s80
      %s95 = sphi 0, %s81
      %s99 = sphi 0, %s99
      %s101 = sphi 0, %s99
      %s102 = sphi 0, %s101
      %s116 = sphi 0, %s102
      %s120 = sphi 0, %s120
      %s122 = sphi 0, %s120
      %s123 = sphi 0, %s122
      %s137 = sphi 0, %s123
      %s141 = sphi 0, %s141
      %s143 = sphi 0, %s141
      %s144 = sphi 0, %s143
      %s158 = sphi 0, %s144
      %s162 = sphi 0, %s162
      %s164 = sphi 0, %s162
      %s165 = sphi 0, %s164
      %s179 = sphi 0, %s165
      %s183 = sphi 0, %s183
      %s185 = sphi 0, %s183
      %s186 = sphi 0, %s185
      %s200 = sphi 0, %s186
      %s204 = sphi 0, %s204
      %s206 = sphi 0, %s204
      %s207 = sphi 0, %s206
      %s221 = sphi 0, %s207
      %s225 = sphi 0, %s225
      %s227 = sphi 0, %s225
      %s228 = sphi 0, %s227
      %s242 = sphi 0, %s228
      %s246 = sphi 0, %s246
      %s248 = sphi 0, %s246
      %s249 = sphi 0, %s248
      %s263 = sphi 0, %s249
      %s267 = sphi 0, %s267
      %s269 = sphi 0, %s267
      %s270 = sphi 0, %s269
      %s284 = sphi 0, %s270
      %s288 = sphi 0, %s288
      %s290 = sphi 0, %s288
      %s291 = sphi 0, %s290
      %s305 = sphi 0, %s291
      %s311 = sphi 0, %s313
      %s314 = sphi 0, %s311
      %s315 = sphi 0, %s314
      %s331 = sphi 0, %s315
    $region4: #{tpu_custom_call.1} parent=1 // loop_header_branch
      %26 = sbr.rel (%p24) target = $region8
    $region5: #{tpu_custom_call.1} parent=1 // loop_body
      %s28 = ssub.s32 %s23, 1
      %s29 = ssub.s32 %s23, 2
      %s30 = sadd.s32 %s23, 1
      %s31 = ssub.s32 %s23, %s30
      %p32 = scmp.eq.s32.totalorder %s31, 0
      %s34 = sadd.s32 %s33, 1
      %s35 = scalar_select %p32, %s33, %s34
      %p38 = pneg %p32
      %p39 = scmp.eq.s32.totalorder %s23, 1
      %p40 = por %p38, %p39
      %p41 = scmp.ne.s32.totalorder %s33, %s36
      %p42 = scmp.eq.s32.totalorder %s23, 0
      %p43 = por %p41, %p42
      %p44 = scmp.ne.s32.totalorder %s33, %s36
      %p45 = scmp.eq.s32.totalorder %s28, 1
      %p46 = por %p44, %p45
      %p47 = scmp.ne.s32.totalorder %s36, %s37
      %p48 = scmp.eq.s32.totalorder %s28, 0
      %p49 = por %p47, %p48
      %p50 = scmp.ne.s32.totalorder %s36, %s37
      %p51 = scmp.eq.s32.totalorder %s29, 1
      %p52 = por %p50, %p51
      %p54 = scmp.ne.s32.totalorder %s37, %s53
      %p55 = scmp.eq.s32.totalorder %s29, 0
      %p56 = por %p54, %p55
      %s58 = sadd.s32 %s57, 1
      %p61 = scmp.eq.s32.totalorder %s23, 1
      %p62 = scmp.ne.s32.totalorder %s57, %s59
      %p63 = scmp.eq.s32.totalorder %s23, 0
      %p64 = por %p62, %p63
      %p65 = scmp.ne.s32.totalorder %s57, %s59
      %p66 = scmp.eq.s32.totalorder %s28, 1
      %p67 = por %p65, %p66
      %p68 = scmp.ne.s32.totalorder %s59, %s60
      %p69 = scmp.eq.s32.totalorder %s28, 0
      %p70 = por %p68, %p69
      %p71 = scmp.ne.s32.totalorder %s59, %s60
      %p72 = scmp.eq.s32.totalorder %s29, 1
      %p73 = por %p71, %p72
      %p75 = scmp.ne.s32.totalorder %s60, %s74
      %p76 = scmp.eq.s32.totalorder %s29, 0
      %p77 = por %p75, %p76
      %s79 = sadd.s32 %s78, 1
      %p82 = scmp.eq.s32.totalorder %s23, 1
      %p83 = scmp.ne.s32.totalorder %s78, %s80
      %p84 = scmp.eq.s32.totalorder %s23, 0
      %p85 = por %p83, %p84
      %p86 = scmp.ne.s32.totalorder %s78, %s80
      %p87 = scmp.eq.s32.totalorder %s28, 1
      %p88 = por %p86, %p87
      %p89 = scmp.ne.s32.totalorder %s80, %s81
      %p90 = scmp.eq.s32.totalorder %s28, 0
      %p91 = por %p89, %p90
      %p92 = scmp.ne.s32.totalorder %s80, %s81
      %p93 = scmp.eq.s32.totalorder %s29, 1
      %p94 = por %p92, %p93
      %p96 = scmp.ne.s32.totalorder %s81, %s95
      %p97 = scmp.eq.s32.totalorder %s29, 0
      %p98 = por %p96, %p97
      %s100 = sadd.s32 %s99, 1
      %p103 = scmp.eq.s32.totalorder %s23, 1
      %p104 = scmp.ne.s32.totalorder %s99, %s101
      %p105 = scmp.eq.s32.totalorder %s23, 0
      %p106 = por %p104, %p105
      %p107 = scmp.ne.s32.totalorder %s99, %s101
      %p108 = scmp.eq.s32.totalorder %s28, 1
      %p109 = por %p107, %p108
      %p110 = scmp.ne.s32.totalorder %s101, %s102
      %p111 = scmp.eq.s32.totalorder %s28, 0
      %p112 = por %p110, %p111
      %p113 = scmp.ne.s32.totalorder %s101, %s102
      %p114 = scmp.eq.s32.totalorder %s29, 1
      %p115 = por %p113, %p114
      %p117 = scmp.ne.s32.totalorder %s102, %s116
      %p118 = scmp.eq.s32.totalorder %s29, 0
      %p119 = por %p117, %p118
      %s121 = sadd.s32 %s120, 1
      %p124 = scmp.eq.s32.totalorder %s23, 1
      %p125 = scmp.ne.s32.totalorder %s120, %s122
      %p126 = scmp.eq.s32.totalorder %s23, 0
      %p127 = por %p125, %p126
      %p128 = scmp.ne.s32.totalorder %s120, %s122
      %p129 = scmp.eq.s32.totalorder %s28, 1
      %p130 = por %p128, %p129
      %p131 = scmp.ne.s32.totalorder %s122, %s123
      %p132 = scmp.eq.s32.totalorder %s28, 0
      %p133 = por %p131, %p132
      %p134 = scmp.ne.s32.totalorder %s122, %s123
      %p135 = scmp.eq.s32.totalorder %s29, 1
      %p136 = por %p134, %p135
      %p138 = scmp.ne.s32.totalorder %s123, %s137
      %p139 = scmp.eq.s32.totalorder %s29, 0
      %p140 = por %p138, %p139
      %s142 = sadd.s32 %s141, 1
      %p145 = scmp.eq.s32.totalorder %s23, 1
      %p146 = scmp.ne.s32.totalorder %s141, %s143
      %p147 = scmp.eq.s32.totalorder %s23, 0
      %p148 = por %p146, %p147
      %p149 = scmp.ne.s32.totalorder %s141, %s143
      %p150 = scmp.eq.s32.totalorder %s28, 1
      %p151 = por %p149, %p150
      %p152 = scmp.ne.s32.totalorder %s143, %s144
      %p153 = scmp.eq.s32.totalorder %s28, 0
      %p154 = por %p152, %p153
      %p155 = scmp.ne.s32.totalorder %s143, %s144
      %p156 = scmp.eq.s32.totalorder %s29, 1
      %p157 = por %p155, %p156
      %p159 = scmp.ne.s32.totalorder %s144, %s158
      %p160 = scmp.eq.s32.totalorder %s29, 0
      %p161 = por %p159, %p160
      %s163 = sadd.s32 %s162, 1
      %p166 = scmp.eq.s32.totalorder %s23, 1
      %p167 = scmp.ne.s32.totalorder %s162, %s164
      %p168 = scmp.eq.s32.totalorder %s23, 0
      %p169 = por %p167, %p168
      %p170 = scmp.ne.s32.totalorder %s162, %s164
      %p171 = scmp.eq.s32.totalorder %s28, 1
      %p172 = por %p170, %p171
      %p173 = scmp.ne.s32.totalorder %s164, %s165
      %p174 = scmp.eq.s32.totalorder %s28, 0
      %p175 = por %p173, %p174
      %p176 = scmp.ne.s32.totalorder %s164, %s165
      %p177 = scmp.eq.s32.totalorder %s29, 1
      %p178 = por %p176, %p177
      %p180 = scmp.ne.s32.totalorder %s165, %s179
      %p181 = scmp.eq.s32.totalorder %s29, 0
      %p182 = por %p180, %p181
      %s184 = sadd.s32 %s183, 1
      %p187 = scmp.eq.s32.totalorder %s23, 1
      %p188 = scmp.ne.s32.totalorder %s183, %s185
      %p189 = scmp.eq.s32.totalorder %s23, 0
      %p190 = por %p188, %p189
      %p191 = scmp.ne.s32.totalorder %s183, %s185
      %p192 = scmp.eq.s32.totalorder %s28, 1
      %p193 = por %p191, %p192
      %p194 = scmp.ne.s32.totalorder %s185, %s186
      %p195 = scmp.eq.s32.totalorder %s28, 0
      %p196 = por %p194, %p195
      %p197 = scmp.ne.s32.totalorder %s185, %s186
      %p198 = scmp.eq.s32.totalorder %s29, 1
      %p199 = por %p197, %p198
      %p201 = scmp.ne.s32.totalorder %s186, %s200
      %p202 = scmp.eq.s32.totalorder %s29, 0
      %p203 = por %p201, %p202
      %s205 = sadd.s32 %s204, 1
      %p208 = scmp.eq.s32.totalorder %s23, 1
      %p209 = scmp.ne.s32.totalorder %s204, %s206
      %p210 = scmp.eq.s32.totalorder %s23, 0
      %p211 = por %p209, %p210
      %p212 = scmp.ne.s32.totalorder %s204, %s206
      %p213 = scmp.eq.s32.totalorder %s28, 1
      %p214 = por %p212, %p213
      %p215 = scmp.ne.s32.totalorder %s206, %s207
      %p216 = scmp.eq.s32.totalorder %s28, 0
      %p217 = por %p215, %p216
      %p218 = scmp.ne.s32.totalorder %s206, %s207
      %p219 = scmp.eq.s32.totalorder %s29, 1
      %p220 = por %p218, %p219
      %p222 = scmp.ne.s32.totalorder %s207, %s221
      %p223 = scmp.eq.s32.totalorder %s29, 0
      %p224 = por %p222, %p223
      %s226 = sadd.s32 %s225, 1
      %p229 = scmp.eq.s32.totalorder %s23, 1
      %p230 = scmp.ne.s32.totalorder %s225, %s227
      %p231 = scmp.eq.s32.totalorder %s23, 0
      %p232 = por %p230, %p231
      %p233 = scmp.ne.s32.totalorder %s225, %s227
      %p234 = scmp.eq.s32.totalorder %s28, 1
      %p235 = por %p233, %p234
      %p236 = scmp.ne.s32.totalorder %s227, %s228
      %p237 = scmp.eq.s32.totalorder %s28, 0
      %p238 = por %p236, %p237
      %p239 = scmp.ne.s32.totalorder %s227, %s228
      %p240 = scmp.eq.s32.totalorder %s29, 1
      %p241 = por %p239, %p240
      %p243 = scmp.ne.s32.totalorder %s228, %s242
      %p244 = scmp.eq.s32.totalorder %s29, 0
      %p245 = por %p243, %p244
      %s247 = sadd.s32 %s246, 1
      %p250 = scmp.eq.s32.totalorder %s23, 1
      %p251 = scmp.ne.s32.totalorder %s246, %s248
      %p252 = scmp.eq.s32.totalorder %s23, 0
      %p253 = por %p251, %p252
      %p254 = scmp.ne.s32.totalorder %s246, %s248
      %p255 = scmp.eq.s32.totalorder %s28, 1
      %p256 = por %p254, %p255
      %p257 = scmp.ne.s32.totalorder %s248, %s249
      %p258 = scmp.eq.s32.totalorder %s28, 0
      %p259 = por %p257, %p258
      %p260 = scmp.ne.s32.totalorder %s248, %s249
      %p261 = scmp.eq.s32.totalorder %s29, 1
      %p262 = por %p260, %p261
      %p264 = scmp.ne.s32.totalorder %s249, %s263
      %p265 = scmp.eq.s32.totalorder %s29, 0
      %p266 = por %p264, %p265
      %s268 = sadd.s32 %s267, 1
      %p271 = scmp.eq.s32.totalorder %s23, 1
      %p272 = scmp.ne.s32.totalorder %s267, %s269
      %p273 = scmp.eq.s32.totalorder %s23, 0
      %p274 = por %p272, %p273
      %p275 = scmp.ne.s32.totalorder %s267, %s269
      %p276 = scmp.eq.s32.totalorder %s28, 1
      %p277 = por %p275, %p276
      %p278 = scmp.ne.s32.totalorder %s269, %s270
      %p279 = scmp.eq.s32.totalorder %s28, 0
      %p280 = por %p278, %p279
      %p281 = scmp.ne.s32.totalorder %s269, %s270
      %p282 = scmp.eq.s32.totalorder %s29, 1
      %p283 = por %p281, %p282
      %p285 = scmp.ne.s32.totalorder %s270, %s284
      %p286 = scmp.eq.s32.totalorder %s29, 0
      %p287 = por %p285, %p286
      %s289 = sadd.s32 %s288, 1
      %p292 = scmp.eq.s32.totalorder %s23, 1
      %p293 = scmp.ne.s32.totalorder %s288, %s290
      %p294 = scmp.eq.s32.totalorder %s23, 0
      %p295 = por %p293, %p294
      %p296 = scmp.ne.s32.totalorder %s288, %s290
      %p297 = scmp.eq.s32.totalorder %s28, 1
      %p298 = por %p296, %p297
      %p299 = scmp.ne.s32.totalorder %s290, %s291
      %p300 = scmp.eq.s32.totalorder %s28, 0
      %p301 = por %p299, %p300
      %p302 = scmp.ne.s32.totalorder %s290, %s291
      %p303 = scmp.eq.s32.totalorder %s29, 1
      %p304 = por %p302, %p303
      %p306 = scmp.ne.s32.totalorder %s291, %s305
      %p307 = scmp.eq.s32.totalorder %s29, 0
      %p308 = por %p306, %p307
      %s309 = ssub.s32 %s23, %s30
      %p310 = scmp.eq.s32.totalorder %s309, 0
      %s312 = sadd.s32 %s311, 1
      %s313 = scalar_select %p310, %s311, %s312
      %p316 = pneg %p310
      %p317 = scmp.eq.s32.totalorder %s23, 1
      %p318 = por %p316, %p317
      %p319 = scmp.ne.s32.totalorder %s311, %s314
      %p320 = scmp.eq.s32.totalorder %s23, 0
      %p321 = por %p319, %p320
      %p322 = scmp.ne.s32.totalorder %s311, %s314
      %p323 = scmp.eq.s32.totalorder %s28, 1
      %p324 = por %p322, %p323
      %p325 = scmp.ne.s32.totalorder %s314, %s315
      %p326 = scmp.eq.s32.totalorder %s28, 0
      %p327 = por %p325, %p326
      %p328 = scmp.ne.s32.totalorder %s314, %s315
      %p329 = scmp.eq.s32.totalorder %s29, 1
      %p330 = por %p328, %p329
      %p332 = scmp.ne.s32.totalorder %s315, %s331
      %p333 = scmp.eq.s32.totalorder %s29, 0
      %p334 = por %p332, %p333
      %p335 = scmp.le.s32.totalorder 1, %s23
      %p336 = scmp.lt.s32.totalorder %s23, 3
      %p337 = pnand %p335, %p336
      %p338 = pneg %p337
      // Predicated region
      $region9: #{tpu_custom_call.1} parent=5 // pred_check
        _
      $region10: #{tpu_custom_call.1} parent=5 // pred_check_branch
        %340 = sbr.rel (%p337) target = $region12
      $region11: #{tpu_custom_call.1} parent=5 // pred_region
        %s341 = ssub.s32 %s23, 1
        // Predicated region
        $region13: #{tpu_custom_call.1} parent=11 // pred_check
          %p342 = pneg %p70
        $region14: #{tpu_custom_call.1} parent=11 // pred_check_branch
          %344 = sbr.rel (%p342) target = $region16
        $region15: #{tpu_custom_call.1} parent=11 // pred_region
          %s346 = ssub.s32 64, 64
          %347 = vsyncadd [#allocation5], %s346
          %s349 = sshll.u32 [#allocation4], 4
          %s350 = int_to_ptr.vmem [resolvable:$true] %s349
          %352 = dma.hbm_to_vmem [thread:$0]  %s1, 64, %s350, [#allocation5]
        $region16: #{tpu_custom_call.1} parent=11 // pred_fallthru
          _
        // Predicated region
        $region17: #{tpu_custom_call.1} parent=11 // pred_check
          %p353 = pneg %p91
        $region18: #{tpu_custom_call.1} parent=11 // pred_check_branch
          %355 = sbr.rel (%p353) target = $region20
        $region19: #{tpu_custom_call.1} parent=11 // pred_region
          _
        $region20: #{tpu_custom_call.1} parent=11 // pred_fallthru
          _
        // Predicated region
        $region21: #{tpu_custom_call.1} parent=11 // pred_check
          %p356 = pneg %p112
        $region22: #{tpu_custom_call.1} parent=11 // pred_check_branch
          %358 = sbr.rel (%p356) target = $region24
        $region23: #{tpu_custom_call.1} parent=11 // pred_region
          _
        $region24: #{tpu_custom_call.1} parent=11 // pred_fallthru
          _
        // Predicated region
        $region25: #{tpu_custom_call.1} parent=11 // pred_check
          %p359 = pneg %p133
        $region26: #{tpu_custom_call.1} parent=11 // pred_check_branch
          %361 = sbr.rel (%p359) target = $region28
        $region27: #{tpu_custom_call.1} parent=11 // pred_region
          _
        $region28: #{tpu_custom_call.1} parent=11 // pred_fallthru
          _
        // Predicated region
        $region29: #{tpu_custom_call.1} parent=11 // pred_check
          %p362 = pneg %p154
        $region30: #{tpu_custom_call.1} parent=11 // pred_check_branch
          %364 = sbr.rel (%p362) target = $region32
        $region31: #{tpu_custom_call.1} parent=11 // pred_region
          _
        $region32: #{tpu_custom_call.1} parent=11 // pred_fallthru
          _
        // Predicated region
        $region33: #{tpu_custom_call.1} parent=11 // pred_check
          %p365 = pneg %p175
        $region34: #{tpu_custom_call.1} parent=11 // pred_check_branch
          %367 = sbr.rel (%p365) target = $region36
        $region35: #{tpu_custom_call.1} parent=11 // pred_region
          _
        $region36: #{tpu_custom_call.1} parent=11 // pred_fallthru
          _
        // Predicated region
        $region37: #{tpu_custom_call.1} parent=11 // pred_check
          %p368 = pneg %p196
        $region38: #{tpu_custom_call.1} parent=11 // pred_check_branch
          %370 = sbr.rel (%p368) target = $region40
        $region39: #{tpu_custom_call.1} parent=11 // pred_region
          _
        $region40: #{tpu_custom_call.1} parent=11 // pred_fallthru
          _
        // Predicated region
        $region41: #{tpu_custom_call.1} parent=11 // pred_check
          %p371 = pneg %p217
        $region42: #{tpu_custom_call.1} parent=11 // pred_check_branch
          %373 = sbr.rel (%p371) target = $region44
        $region43: #{tpu_custom_call.1} parent=11 // pred_region
          _
        $region44: #{tpu_custom_call.1} parent=11 // pred_fallthru
          _
        // Predicated region
        $region45: #{tpu_custom_call.1} parent=11 // pred_check
          %p374 = pneg %p238
        $region46: #{tpu_custom_call.1} parent=11 // pred_check_branch
          %376 = sbr.rel (%p374) target = $region48
        $region47: #{tpu_custom_call.1} parent=11 // pred_region
          %s378 = ssub.s32 512, 512
          %379 = vsyncadd [#allocation7], %s378
          %s380 = sshll.u32 [#allocation6], 4
          %s381 = int_to_ptr.vmem [resolvable:$true] %s380
          %386 = dma.hbm_to_vmem [thread:$0]  %s9, 512, %s381, [#allocation7], 128, 128, 8
        $region48: #{tpu_custom_call.1} parent=11 // pred_fallthru
          _
        // Predicated region
        $region49: #{tpu_custom_call.1} parent=11 // pred_check
          %p387 = pneg %p259
        $region50: #{tpu_custom_call.1} parent=11 // pred_check_branch
          %389 = sbr.rel (%p387) target = $region52
        $region51: #{tpu_custom_call.1} parent=11 // pred_region
          _
        $region52: #{tpu_custom_call.1} parent=11 // pred_fallthru
          _
        // Predicated region
        $region53: #{tpu_custom_call.1} parent=11 // pred_check
          %p390 = pneg %p280
        $region54: #{tpu_custom_call.1} parent=11 // pred_check_branch
          %392 = sbr.rel (%p390) target = $region56
        $region55: #{tpu_custom_call.1} parent=11 // pred_region
          _
        $region56: #{tpu_custom_call.1} parent=11 // pred_fallthru
          _
        // Predicated region
        $region57: #{tpu_custom_call.1} parent=11 // pred_check
          %p393 = pneg %p301
        $region58: #{tpu_custom_call.1} parent=11 // pred_check_branch
          %395 = sbr.rel (%p393) target = $region60
        $region59: #{tpu_custom_call.1} parent=11 // pred_region
          _
        $region60: #{tpu_custom_call.1} parent=11 // pred_fallthru
          _
      $region12: #{tpu_custom_call.1} parent=5 // pred_fallthru
        _
      %p396 = scmp.lt.s32.totalorder %s23, 2
      // Predicated region
      $region61: #{tpu_custom_call.1} parent=5 // pred_check
        %p397 = pneg %p396
      $region62: #{tpu_custom_call.1} parent=5 // pred_check_branch
        %399 = sbr.rel (%p397) target = $region64
      $region63: #{tpu_custom_call.1} parent=5 // pred_region
        // Predicated region
        $region65: #{tpu_custom_call.1} parent=63 // pred_check
          %p400 = pneg %p43
        $region66: #{tpu_custom_call.1} parent=63 // pred_check_branch
          %402 = sbr.rel (%p400) target = $region68
        $region67: #{tpu_custom_call.1} parent=63 // pred_region
          %p403 = scmp.lt.s32.totalorder %s23, 1
          %s404 = scalar_select %p403, %s23, 1
          %s405 = smul.addr %s404, 8
          %s406 = scalar_lea.vmem %s0, %s405
        $region68: #{tpu_custom_call.1} parent=63 // pred_fallthru
          _
      $region64: #{tpu_custom_call.1} parent=5 // pred_fallthru
        _
      %p407 = scmp.le.s32.totalorder 1, %s23
      %p408 = scmp.lt.s32.totalorder %s23, 3
      %p409 = pnand %p407, %p408
      %p410 = pneg %p409
      // Predicated region
      $region69: #{tpu_custom_call.1} parent=5 // pred_check
        _
      $region70: #{tpu_custom_call.1} parent=5 // pred_check_branch
        %412 = sbr.rel (%p409) target = $region72
      $region71: #{tpu_custom_call.1} parent=5 // pred_region
        %s413 = ssub.s32 %s23, 1
        // Predicated region
        $region73: #{tpu_custom_call.1} parent=71 // pred_check
          %p414 = pneg %p70
        $region74: #{tpu_custom_call.1} parent=71 // pred_check_branch
          %416 = sbr.rel (%p414) target = $region76
        $region75: #{tpu_custom_call.1} parent=71 // pred_region
          %417 = dma.done [#allocation5], 64
        $region76: #{tpu_custom_call.1} parent=71 // pred_fallthru
          _
        // Predicated region
        $region77: #{tpu_custom_call.1} parent=71 // pred_check
          %p418 = pneg %p238
        $region78: #{tpu_custom_call.1} parent=71 // pred_check_branch
          %420 = sbr.rel (%p418) target = $region80
        $region79: #{tpu_custom_call.1} parent=71 // pred_region
          %421 = dma.done [#allocation7], 512
        $region80: #{tpu_custom_call.1} parent=71 // pred_fallthru
          _
        %p422 = scmp.lt.s32.totalorder %s28, 1
        %s423 = scalar_select %p422, %s28, 1
        %s424 = smul.addr %s423, 8
        %s425 = scalar_lea.vmem %s0, %s424
        %p426 = pneg %p49
        %p427 = pneg %p46
        %p428 = pneg %p70
        %p429 = pneg %p67
        %p430 = pneg %p91
        %p431 = pneg %p88
        %p432 = pneg %p112
        %p433 = pneg %p109
        %p434 = pneg %p133
        %p435 = pneg %p130
        %p436 = pneg %p154
        %p437 = pneg %p151
        %p438 = pneg %p175
        %p439 = pneg %p172
        %p440 = pneg %p196
        %p441 = pneg %p193
        %p442 = pneg %p217
        %p443 = pneg %p214
        %p444 = pneg %p238
        %p445 = pneg %p235
        %p446 = pneg %p259
        %p447 = pneg %p256
        %p448 = pneg %p280
        %p449 = pneg %p277
        %p450 = pneg %p301
        %p451 = pneg %p298
        %p452 = pneg %p327
        %p453 = pneg %p324
        %p454 = scmp.lt.s32.totalorder %s28, 1
        %s455 = scalar_select %p454, %s28, 1
        %s456 = scalar_lea.vmem %s13, %s455
        %p457 = scmp.lt.s32.totalorder %s28, 1
        %s458 = scalar_select %p457, %s28, 1
        %s459 = smul.addr %s458, 8
        %s460 = scalar_lea.vmem %s0, %s459
        %p461 = scmp.lt.s32.totalorder %s28, 1
        %s462 = scalar_select %p461, %s28, 1
        %s463 = scalar_lea.vmem %s13, %s462
        %v464 = vld [vmem:[%s460] sm:$0xff]
        %v465 = vld [vmem:[#allocation4] sm:$0xf]
        %v466 = vld [vmem:[%s2] sm:$0x1]
        %v468 = vlaneseq
        %v469 = vshrl.u32 %v468, 7
        %v470 = vsub.s32 0, %v469
        %v471 = vrot.slane %v466, %v470
        %vm473 = vcmask 31744
        %v475 = vsel %vm473, %v464, 0
        %vm477 = vcmask 1043456
        %v479 = vsel %vm477, %v465, 0
        %481 = vmatprep.subr.mxu0 0.0
        %482 = vmatpush1.msra.mxu0 %v479
        %483 = vmatprep.subr.mxu0 0.0
        %484 = vmatpush1.msra.mxu0 0.0
        %485 = vmatprep.subr.mxu0 0.0
        %486 = vmatpush1.msra.mxu0 0.0
        %487 = vmatprep.subr.mxu0 0.0
        %488 = vmatpush1.msra.mxu0 0.0
        %489 = vmatprep.subr.mxu0 0.0
        %490 = vmatpush1.msra.mxu0 0.0
        %491 = vmatprep.subr.mxu0 0.0
        %492 = vmatpush1.msra.mxu0 0.0
        %493 = vmatprep.subr.mxu0 0.0
        %494 = vmatpush1.msra.mxu0 0.0
        %495 = vmatprep.subr.mxu0 0.0
        %496 = vmatpush1.msra.mxu0 0.0
        %497 = vmatprep.subr.mxu0 0.0
        %498 = vmatpush1.msra.mxu0 0.0
        %499 = vmatprep.subr.mxu0 0.0
        %500 = vmatpush1.msra.mxu0 0.0
        %501 = vmatprep.subr.mxu0 0.0
        %502 = vmatpush1.msra.mxu0 0.0
        %503 = vmatprep.subr.mxu0 0.0
        %504 = vmatpush1.msra.mxu0 0.0
        %505 = vmatprep.subr.mxu0 0.0
        %506 = vmatpush1.msra.mxu0 0.0
        %507 = vmatprep.subr.mxu0 0.0
        %508 = vmatpush1.msra.mxu0 0.0
        %509 = vmatprep.subr.mxu0 0.0
        %510 = vmatpush1.msra.mxu0 0.0
        %511 = vmatprep.subr.mxu0 0.0
        %512 = vmatpush1.msra.mxu0 0.0
        %513 = vmatprep.subr.mxu0 0.0
        %514 = vmatpush1.msra.mxu0 0.0
        %515 = vmatprep.subr.mxu0 0.0
        %516 = vmatpush1.msra.mxu0 0.0
        %517 = vmatprep.subr.mxu0 0.0
        %518 = vmatpush1.msra.mxu0 0.0
        %519 = vmatprep.subr.mxu0 0.0
        %520 = vmatpush1.msra.mxu0 0.0
        %521 = vmatprep.subr.mxu0 0.0
        %522 = vmatpush1.msra.mxu0 0.0
        %523 = vmatprep.subr.mxu0 0.0
        %524 = vmatpush1.msra.mxu0 0.0
        %525 = vmatprep.subr.mxu0 0.0
        %526 = vmatpush1.msra.mxu0 0.0
        %527 = vmatprep.subr.mxu0 0.0
        %528 = vmatpush1.msra.mxu0 0.0
        %529 = vmatprep.subr.mxu0 0.0
        %530 = vmatpush1.msra.mxu0 0.0
        %531 = vmatprep.subr.mxu0 0.0
        %532 = vmatpush1.msra.mxu0 0.0
        %533 = vmatprep.subr.mxu0 0.0
        %534 = vmatpush1.msra.mxu0 0.0
        %535 = vmatprep.subr.mxu0 0.0
        %536 = vmatpush1.msra.mxu0 0.0
        %537 = vmatprep.subr.mxu0 0.0
        %538 = vmatpush1.msra.mxu0 0.0
        %539 = vmatprep.subr.mxu0 0.0
        %540 = vmatpush1.msra.mxu0 0.0
        %541 = vmatprep.subr.mxu0 0.0
        %542 = vmatpush1.msra.mxu0 0.0
        %543 = vmatprep.subr.mxu0 0.0
        %544 = vmatpush1.msra.mxu0 0.0
        %545 = vmatprep.mubr.f32.mxu0 0.0
        %546 = vmatmul.mubr.f32.gmra.mrb[0].mxu0 %v475
        %v547 = vpop.f32.mrb[0].mxu0
        %v548 = vadd.f32 %v471, %v547
        %v549 = vpop.f32.mrb[0].mxu0
        %550 = vdwg.mxu0
        %vm551 = vcmp.ge.f32.partialorder %v548, 0.0
        %v552 = vmul.f32 %v548, 0.01
        %v553 = vsel %vm551, %v548, %v552
        %v554 = vld [vmem:[%s3] sm:$0xff]
        %v555 = vld [vmem:[%s3 + $0x8] sm:$0xff]
        %v556 = vld [vmem:[%s3 + $0x10] sm:$0xff]
        %v557 = vld [vmem:[%s3 + $0x18] sm:$0xff]
        %v558 = vld [vmem:[%s4] sm:$0x1]
        %v560 = vlaneseq
        %v561 = vshrl.u32 %v560, 7
        %v562 = vsub.s32 0, %v561
        %v563 = vrot.slane %v558, %v562
        %vm565 = vcmask 261120
        %v567 = vsel %vm565, %v553, 0
        %569 = vmatprep.subr.mxu0 0.0
        %570 = vmatpush1.msra.mxu0 %v554
        %571 = vmatprep.subr.mxu0 0.0
        %572 = vmatpush1.msra.mxu0 %v555
        %573 = vmatprep.subr.mxu0 0.0
        %574 = vmatpush1.msra.mxu0 %v556
        %575 = vmatprep.subr.mxu0 0.0
        %576 = vmatpush1.msra.mxu0 %v557
        %577 = vmatprep.subr.mxu0 0.0
        %578 = vmatpush1.msra.mxu0 0.0
        %579 = vmatprep.subr.mxu0 0.0
        %580 = vmatpush1.msra.mxu0 0.0
        %581 = vmatprep.subr.mxu0 0.0
        %582 = vmatpush1.msra.mxu0 0.0
        %583 = vmatprep.subr.mxu0 0.0
        %584 = vmatpush1.msra.mxu0 0.0
        %585 = vmatprep.subr.mxu0 0.0
        %586 = vmatpush1.msra.mxu0 0.0
        %587 = vmatprep.subr.mxu0 0.0
        %588 = vmatpush1.msra.mxu0 0.0
        %589 = vmatprep.subr.mxu0 0.0
        %590 = vmatpush1.msra.mxu0 0.0
        %591 = vmatprep.subr.mxu0 0.0
        %592 = vmatpush1.msra.mxu0 0.0
        %593 = vmatprep.subr.mxu0 0.0
        %594 = vmatpush1.msra.mxu0 0.0
        %595 = vmatprep.subr.mxu0 0.0
        %596 = vmatpush1.msra.mxu0 0.0
        %597 = vmatprep.subr.mxu0 0.0
        %598 = vmatpush1.msra.mxu0 0.0
        %599 = vmatprep.subr.mxu0 0.0
        %600 = vmatpush1.msra.mxu0 0.0
        %601 = vmatprep.subr.mxu0 0.0
        %602 = vmatpush1.msra.mxu0 0.0
        %603 = vmatprep.subr.mxu0 0.0
        %604 = vmatpush1.msra.mxu0 0.0
        %605 = vmatprep.subr.mxu0 0.0
        %606 = vmatpush1.msra.mxu0 0.0
        %607 = vmatprep.subr.mxu0 0.0
        %608 = vmatpush1.msra.mxu0 0.0
        %609 = vmatprep.subr.mxu0 0.0
        %610 = vmatpush1.msra.mxu0 0.0
        %611 = vmatprep.subr.mxu0 0.0
        %612 = vmatpush1.msra.mxu0 0.0
        %613 = vmatprep.subr.mxu0 0.0
        %614 = vmatpush1.msra.mxu0 0.0
        %615 = vmatprep.subr.mxu0 0.0
        %616 = vmatpush1.msra.mxu0 0.0
        %617 = vmatprep.subr.mxu0 0.0
        %618 = vmatpush1.msra.mxu0 0.0
        %619 = vmatprep.subr.mxu0 0.0
        %620 = vmatpush1.msra.mxu0 0.0
        %621 = vmatprep.subr.mxu0 0.0
        %622 = vmatpush1.msra.mxu0 0.0
        %623 = vmatprep.subr.mxu0 0.0
        %624 = vmatpush1.msra.mxu0 0.0
        %625 = vmatprep.subr.mxu0 0.0
        %626 = vmatpush1.msra.mxu0 0.0
        %627 = vmatprep.subr.mxu0 0.0
        %628 = vmatpush1.msra.mxu0 0.0
        %629 = vmatprep.subr.mxu0 0.0
        %630 = vmatpush1.msra.mxu0 0.0
        %631 = vmatprep.subr.mxu0 0.0
        %632 = vmatpush1.msra.mxu0 0.0
        %633 = vmatprep.mubr.f32.mxu0 0.0
        %634 = vmatmul.mubr.f32.gmra.mrb[0].mxu0 %v567
        %v635 = vpop.f32.mrb[0].mxu0
        %v636 = vadd.f32 %v563, %v635
        %v637 = vpop.f32.mrb[0].mxu0
        %638 = vdwg.mxu0
        %v639 = vld [vmem:[%s5] sm:$0xff]
        %v640 = vld [vmem:[%s5 + $0x8] sm:$0xff]
        %v641 = vld [vmem:[%s5 + $0x10] sm:$0xff]
        %v642 = vld [vmem:[%s5 + $0x18] sm:$0xff]
        %v643 = vld [vmem:[%s7] sm:$0x1]
        %v645 = vlaneseq
        %v646 = vshrl.u32 %v645, 7
        %v647 = vsub.s32 0, %v646
        %v648 = vrot.slane %v643, %v647
        %v651 = vsel %vm565, %v636, 0
        %653 = vmatprep.subr.mxu0 0.0
        %654 = vmatpush1.msra.mxu0 %v639
        %655 = vmatprep.subr.mxu0 0.0
        %656 = vmatpush1.msra.mxu0 %v640
        %657 = vmatprep.subr.mxu0 0.0
        %658 = vmatpush1.msra.mxu0 %v641
        %659 = vmatprep.subr.mxu0 0.0
        %660 = vmatpush1.msra.mxu0 %v642
        %661 = vmatprep.subr.mxu0 0.0
        %662 = vmatpush1.msra.mxu0 0.0
        %663 = vmatprep.subr.mxu0 0.0
        %664 = vmatpush1.msra.mxu0 0.0
        %665 = vmatprep.subr.mxu0 0.0
        %666 = vmatpush1.msra.mxu0 0.0
        %667 = vmatprep.subr.mxu0 0.0
        %668 = vmatpush1.msra.mxu0 0.0
        %669 = vmatprep.subr.mxu0 0.0
        %670 = vmatpush1.msra.mxu0 0.0
        %671 = vmatprep.subr.mxu0 0.0
        %672 = vmatpush1.msra.mxu0 0.0
        %673 = vmatprep.subr.mxu0 0.0
        %674 = vmatpush1.msra.mxu0 0.0
        %675 = vmatprep.subr.mxu0 0.0
        %676 = vmatpush1.msra.mxu0 0.0
        %677 = vmatprep.subr.mxu0 0.0
        %678 = vmatpush1.msra.mxu0 0.0
        %679 = vmatprep.subr.mxu0 0.0
        %680 = vmatpush1.msra.mxu0 0.0
        %681 = vmatprep.subr.mxu0 0.0
        %682 = vmatpush1.msra.mxu0 0.0
        %683 = vmatprep.subr.mxu0 0.0
        %684 = vmatpush1.msra.mxu0 0.0
        %685 = vmatprep.subr.mxu0 0.0
        %686 = vmatpush1.msra.mxu0 0.0
        %687 = vmatprep.subr.mxu0 0.0
        %688 = vmatpush1.msra.mxu0 0.0
        %689 = vmatprep.subr.mxu0 0.0
        %690 = vmatpush1.msra.mxu0 0.0
        %691 = vmatprep.subr.mxu0 0.0
        %692 = vmatpush1.msra.mxu0 0.0
        %693 = vmatprep.subr.mxu0 0.0
        %694 = vmatpush1.msra.mxu0 0.0
        %695 = vmatprep.subr.mxu0 0.0
        %696 = vmatpush1.msra.mxu0 0.0
        %697 = vmatprep.subr.mxu0 0.0
        %698 = vmatpush1.msra.mxu0 0.0
        %699 = vmatprep.subr.mxu0 0.0
        %700 = vmatpush1.msra.mxu0 0.0
        %701 = vmatprep.subr.mxu0 0.0
        %702 = vmatpush1.msra.mxu0 0.0
        %703 = vmatprep.subr.mxu0 0.0
        %704 = vmatpush1.msra.mxu0 0.0
        %705 = vmatprep.subr.mxu0 0.0
        %706 = vmatpush1.msra.mxu0 0.0
        %707 = vmatprep.subr.mxu0 0.0
        %708 = vmatpush1.msra.mxu0 0.0
        %709 = vmatprep.subr.mxu0 0.0
        %710 = vmatpush1.msra.mxu0 0.0
        %711 = vmatprep.subr.mxu0 0.0
        %712 = vmatpush1.msra.mxu0 0.0
        %713 = vmatprep.subr.mxu0 0.0
        %714 = vmatpush1.msra.mxu0 0.0
        %715 = vmatprep.subr.mxu0 0.0
        %716 = vmatpush1.msra.mxu0 0.0
        %717 = vmatprep.mubr.f32.mxu0 0.0
        %718 = vmatmul.mubr.f32.gmra.mrb[0].mxu0 %v651
        %v719 = vpop.f32.mrb[0].mxu0
        %v720 = vadd.f32 %v648, %v719
        %v721 = vpop.f32.mrb[0].mxu0
        %722 = vdwg.mxu0
        %v723 = vld [vmem:[%s6] sm:$0xff]
        %v724 = vld [vmem:[%s6 + $0x8] sm:$0xff]
        %v725 = vld [vmem:[%s6 + $0x10] sm:$0xff]
        %v726 = vld [vmem:[%s6 + $0x18] sm:$0xff]
        %v728 = vsel %vm565, 0.0, 0
        %730 = vmatprep.subr.mxu0 0.0
        %731 = vmatpush1.msra.mxu0 %v723
        %732 = vmatprep.subr.mxu0 0.0
        %733 = vmatpush1.msra.mxu0 %v724
        %734 = vmatprep.subr.mxu0 0.0
        %735 = vmatpush1.msra.mxu0 %v725
        %736 = vmatprep.subr.mxu0 0.0
        %737 = vmatpush1.msra.mxu0 %v726
        %738 = vmatprep.subr.mxu0 0.0
        %739 = vmatpush1.msra.mxu0 0.0
        %740 = vmatprep.subr.mxu0 0.0
        %741 = vmatpush1.msra.mxu0 0.0
        %742 = vmatprep.subr.mxu0 0.0
        %743 = vmatpush1.msra.mxu0 0.0
        %744 = vmatprep.subr.mxu0 0.0
        %745 = vmatpush1.msra.mxu0 0.0
        %746 = vmatprep.subr.mxu0 0.0
        %747 = vmatpush1.msra.mxu0 0.0
        %748 = vmatprep.subr.mxu0 0.0
        %749 = vmatpush1.msra.mxu0 0.0
        %750 = vmatprep.subr.mxu0 0.0
        %751 = vmatpush1.msra.mxu0 0.0
        %752 = vmatprep.subr.mxu0 0.0
        %753 = vmatpush1.msra.mxu0 0.0
        %754 = vmatprep.subr.mxu0 0.0
        %755 = vmatpush1.msra.mxu0 0.0
        %756 = vmatprep.subr.mxu0 0.0
        %757 = vmatpush1.msra.mxu0 0.0
        %758 = vmatprep.subr.mxu0 0.0
        %759 = vmatpush1.msra.mxu0 0.0
        %760 = vmatprep.subr.mxu0 0.0
        %761 = vmatpush1.msra.mxu0 0.0
        %762 = vmatprep.subr.mxu0 0.0
        %763 = vmatpush1.msra.mxu0 0.0
        %764 = vmatprep.subr.mxu0 0.0
        %765 = vmatpush1.msra.mxu0 0.0
        %766 = vmatprep.subr.mxu0 0.0
        %767 = vmatpush1.msra.mxu0 0.0
        %768 = vmatprep.subr.mxu0 0.0
        %769 = vmatpush1.msra.mxu0 0.0
        %770 = vmatprep.subr.mxu0 0.0
        %771 = vmatpush1.msra.mxu0 0.0
        %772 = vmatprep.subr.mxu0 0.0
        %773 = vmatpush1.msra.mxu0 0.0
        %774 = vmatprep.subr.mxu0 0.0
        %775 = vmatpush1.msra.mxu0 0.0
        %776 = vmatprep.subr.mxu0 0.0
        %777 = vmatpush1.msra.mxu0 0.0
        %778 = vmatprep.subr.mxu0 0.0
        %779 = vmatpush1.msra.mxu0 0.0
        %780 = vmatprep.subr.mxu0 0.0
        %781 = vmatpush1.msra.mxu0 0.0
        %782 = vmatprep.subr.mxu0 0.0
        %783 = vmatpush1.msra.mxu0 0.0
        %784 = vmatprep.subr.mxu0 0.0
        %785 = vmatpush1.msra.mxu0 0.0
        %786 = vmatprep.subr.mxu0 0.0
        %787 = vmatpush1.msra.mxu0 0.0
        %788 = vmatprep.subr.mxu0 0.0
        %789 = vmatpush1.msra.mxu0 0.0
        %790 = vmatprep.subr.mxu0 0.0
        %791 = vmatpush1.msra.mxu0 0.0
        %792 = vmatprep.subr.mxu0 0.0
        %793 = vmatpush1.msra.mxu0 0.0
        %794 = vmatprep.mubr.f32.mxu0 0.0
        %795 = vmatmul.mubr.f32.gmra.mrb[0].mxu0 %v728
        %v796 = vpop.f32.mrb[0].mxu0
        %v797 = vadd.f32 0.0, %v796
        %v798 = vpop.f32.mrb[0].mxu0
        %799 = vdwg.mxu0
        %v800 = vadd.f32 %v720, %v797
        %v801 = vxor.u32 %v800, 2147483648
        %v802 = vmul.f32 %v801, 1.442695
        %v803 = vpow.pop %v802
        %v804 = vadd.f32 %v803, 1.0
        %v805 = vrcp.pop %v804
        %v806 = vmul.f32 1.0, %v805
        %v807 = vtanh.pop %v800
        %v808 = vmul.f32 %v806, 0.0
        %810 = vrot.lane.b32.xlu0 %v807, 32
        %v811 = vpop.permute.xlu0 %810
        %v813 = vmul.f32 %v806, %v811
        %815 = vrot.lane.b32.xlu0 %v813, 32
        %v816 = vpop.permute.xlu0 %815
        %v818 = vadd.f32 %v808, %v816
        %v819 = vtanh.pop %v818
        %821 = vrot.lane.b32.xlu0 %v819, 32
        %v822 = vpop.permute.xlu0 %821
        %v824 = vmul.f32 %v806, %v822
        %826 = vrot.lane.b32.xlu0 %v824, 64
        %v827 = vpop.permute.xlu0 %826
        %vm829 = vcmask 253952
        %830 = vst.msk [vmem:[#allocation2] sm:$0x1] %vm829, %v827
        %v831 = vsel %vm565, %v827, 0
        %833 = vmatprep.subr.mxu0 0.0
        %834 = vmatpush1.msra.mxu0 %v723
        %835 = vmatprep.subr.mxu0 0.0
        %836 = vmatpush1.msra.mxu0 %v724
        %837 = vmatprep.subr.mxu0 0.0
        %838 = vmatpush1.msra.mxu0 %v725
        %839 = vmatprep.subr.mxu0 0.0
        %840 = vmatpush1.msra.mxu0 %v726
        %841 = vmatprep.subr.mxu0 0.0
        %842 = vmatpush1.msra.mxu0 0.0
        %843 = vmatprep.subr.mxu0 0.0
        %844 = vmatpush1.msra.mxu0 0.0
        %845 = vmatprep.subr.mxu0 0.0
        %846 = vmatpush1.msra.mxu0 0.0
        %847 = vmatprep.subr.mxu0 0.0
        %848 = vmatpush1.msra.mxu0 0.0
        %849 = vmatprep.subr.mxu0 0.0
        %850 = vmatpush1.msra.mxu0 0.0
        %851 = vmatprep.subr.mxu0 0.0
        %852 = vmatpush1.msra.mxu0 0.0
        %853 = vmatprep.subr.mxu0 0.0
        %854 = vmatpush1.msra.mxu0 0.0
        %855 = vmatprep.subr.mxu0 0.0
        %856 = vmatpush1.msra.mxu0 0.0
        %857 = vmatprep.subr.mxu0 0.0
        %858 = vmatpush1.msra.mxu0 0.0
        %859 = vmatprep.subr.mxu0 0.0
        %860 = vmatpush1.msra.mxu0 0.0
        %861 = vmatprep.subr.mxu0 0.0
        %862 = vmatpush1.msra.mxu0 0.0
        %863 = vmatprep.subr.mxu0 0.0
        %864 = vmatpush1.msra.mxu0 0.0
        %865 = vmatprep.subr.mxu0 0.0
        %866 = vmatpush1.msra.mxu0 0.0
        %867 = vmatprep.subr.mxu0 0.0
        %868 = vmatpush1.msra.mxu0 0.0
        %869 = vmatprep.subr.mxu0 0.0
        %870 = vmatpush1.msra.mxu0 0.0
        %871 = vmatprep.subr.mxu0 0.0
        %872 = vmatpush1.msra.mxu0 0.0
        %873 = vmatprep.subr.mxu0 0.0
        %874 = vmatpush1.msra.mxu0 0.0
        %875 = vmatprep.subr.mxu0 0.0
        %876 = vmatpush1.msra.mxu0 0.0
        %877 = vmatprep.subr.mxu0 0.0
        %878 = vmatpush1.msra.mxu0 0.0
        %879 = vmatprep.subr.mxu0 0.0
        %880 = vmatpush1.msra.mxu0 0.0
        %881 = vmatprep.subr.mxu0 0.0
        %882 = vmatpush1.msra.mxu0 0.0
        %883 = vmatprep.subr.mxu0 0.0
        %884 = vmatpush1.msra.mxu0 0.0
        %885 = vmatprep.subr.mxu0 0.0
        %886 = vmatpush1.msra.mxu0 0.0
        %887 = vmatprep.subr.mxu0 0.0
        %888 = vmatpush1.msra.mxu0 0.0
        %889 = vmatprep.subr.mxu0 0.0
        %890 = vmatpush1.msra.mxu0 0.0
        %891 = vmatprep.subr.mxu0 0.0
        %892 = vmatpush1.msra.mxu0 0.0
        %893 = vmatprep.subr.mxu0 0.0
        %894 = vmatpush1.msra.mxu0 0.0
        %895 = vmatprep.subr.mxu0 0.0
        %896 = vmatpush1.msra.mxu0 0.0
        %897 = vmatprep.mubr.f32.mxu0 0.0
        %898 = vmatmul.mubr.f32.gmra.mrb[0].mxu0 %v831
        %v899 = vpop.f32.mrb[0].mxu0
        %v900 = vadd.f32 0.0, %v899
        %v901 = vpop.f32.mrb[0].mxu0
        %902 = vdwg.mxu0
        %v904 = vrot.slane %v900, 7
        %v906 = vadd.f32 %v720, %v904
        %v907 = vxor.u32 %v906, 2147483648
        %v908 = vmul.f32 %v907, 1.442695
        %v909 = vpow.pop %v908
        %v910 = vadd.f32 %v909, 1.0
        %v911 = vrcp.pop %v910
        %v912 = vmul.f32 1.0, %v911
        %v913 = vtanh.pop %v906
        %v915 = vrot.slane %v818, 7
        %v917 = vmul.f32 %v912, %v915
        %919 = vrot.lane.b32.xlu0 %v913, 32
        %v920 = vpop.permute.xlu0 %919
        %v922 = vmul.f32 %v912, %v920
        %924 = vrot.lane.b32.xlu0 %v922, 32
        %v925 = vpop.permute.xlu0 %924
        %v927 = vadd.f32 %v917, %v925
        %v928 = vtanh.pop %v927
        %930 = vrot.lane.b32.xlu0 %v928, 32
        %v931 = vpop.permute.xlu0 %930
        %v933 = vmul.f32 %v912, %v931
        %935 = vrot.lane.b32.xlu0 %v933, 64
        %v936 = vpop.permute.xlu0 %935
        %vm938 = vcmask 254977
        %939 = vst.msk [vmem:[#allocation2] sm:$0x2] %vm938, %v936
        %v940 = vrot.slane %v933, 1
        %941 = vrot.lane.b32.xlu0 %v940, 64
        %v942 = vpop.permute.xlu0 %941
        %v943 = vsel %vm565, %v942, 0
        %945 = vmatprep.subr.mxu0 0.0
        %946 = vmatpush1.msra.mxu0 %v723
        %947 = vmatprep.subr.mxu0 0.0
        %948 = vmatpush1.msra.mxu0 %v724
        %949 = vmatprep.subr.mxu0 0.0
        %950 = vmatpush1.msra.mxu0 %v725
        %951 = vmatprep.subr.mxu0 0.0
        %952 = vmatpush1.msra.mxu0 %v726
        %953 = vmatprep.subr.mxu0 0.0
        %954 = vmatpush1.msra.mxu0 0.0
        %955 = vmatprep.subr.mxu0 0.0
        %956 = vmatpush1.msra.mxu0 0.0
        %957 = vmatprep.subr.mxu0 0.0
        %958 = vmatpush1.msra.mxu0 0.0
        %959 = vmatprep.subr.mxu0 0.0
        %960 = vmatpush1.msra.mxu0 0.0
        %961 = vmatprep.subr.mxu0 0.0
        %962 = vmatpush1.msra.mxu0 0.0
        %963 = vmatprep.subr.mxu0 0.0
        %964 = vmatpush1.msra.mxu0 0.0
        %965 = vmatprep.subr.mxu0 0.0
        %966 = vmatpush1.msra.mxu0 0.0
        %967 = vmatprep.subr.mxu0 0.0
        %968 = vmatpush1.msra.mxu0 0.0
        %969 = vmatprep.subr.mxu0 0.0
        %970 = vmatpush1.msra.mxu0 0.0
        %971 = vmatprep.subr.mxu0 0.0
        %972 = vmatpush1.msra.mxu0 0.0
        %973 = vmatprep.subr.mxu0 0.0
        %974 = vmatpush1.msra.mxu0 0.0
        %975 = vmatprep.subr.mxu0 0.0
        %976 = vmatpush1.msra.mxu0 0.0
        %977 = vmatprep.subr.mxu0 0.0
        %978 = vmatpush1.msra.mxu0 0.0
        %979 = vmatprep.subr.mxu0 0.0
        %980 = vmatpush1.msra.mxu0 0.0
        %981 = vmatprep.subr.mxu0 0.0
        %982 = vmatpush1.msra.mxu0 0.0
        %983 = vmatprep.subr.mxu0 0.0
        %984 = vmatpush1.msra.mxu0 0.0
        %985 = vmatprep.subr.mxu0 0.0
        %986 = vmatpush1.msra.mxu0 0.0
        %987 = vmatprep.subr.mxu0 0.0
        %988 = vmatpush1.msra.mxu0 0.0
        %989 = vmatprep.subr.mxu0 0.0
        %990 = vmatpush1.msra.mxu0 0.0
        %991 = vmatprep.subr.mxu0 0.0
        %992 = vmatpush1.msra.mxu0 0.0
        %993 = vmatprep.subr.mxu0 0.0
        %994 = vmatpush1.msra.mxu0 0.0
        %995 = vmatprep.subr.mxu0 0.0
        %996 = vmatpush1.msra.mxu0 0.0
        %997 = vmatprep.subr.mxu0 0.0
        %998 = vmatpush1.msra.mxu0 0.0
        %999 = vmatprep.subr.mxu0 0.0
        %1000 = vmatpush1.msra.mxu0 0.0
        %1001 = vmatprep.subr.mxu0 0.0
        %1002 = vmatpush1.msra.mxu0 0.0
        %1003 = vmatprep.subr.mxu0 0.0
        %1004 = vmatpush1.msra.mxu0 0.0
        %1005 = vmatprep.subr.mxu0 0.0
        %1006 = vmatpush1.msra.mxu0 0.0
        %1007 = vmatprep.subr.mxu0 0.0
        %1008 = vmatpush1.msra.mxu0 0.0
        %1009 = vmatprep.mubr.f32.mxu0 0.0
        %1010 = vmatmul.mubr.f32.gmra.mrb[0].mxu0 %v943
        %v1011 = vpop.f32.mrb[0].mxu0
        %v1012 = vadd.f32 0.0, %v1011
        %v1013 = vpop.f32.mrb[0].mxu0
        %1014 = vdwg.mxu0
        %v1016 = vrot.slane %v1012, 6
        %v1018 = vadd.f32 %v720, %v1016
        %v1019 = vxor.u32 %v1018, 2147483648
        %v1020 = vmul.f32 %v1019, 1.442695
        %v1021 = vpow.pop %v1020
        %v1022 = vadd.f32 %v1021, 1.0
        %v1023 = vrcp.pop %v1022
        %v1024 = vmul.f32 1.0, %v1023
        %v1025 = vtanh.pop %v1018
        %v1027 = vrot.slane %v927, 7
        %v1029 = vmul.f32 %v1024, %v1027
        %1031 = vrot.lane.b32.xlu0 %v1025, 32
        %v1032 = vpop.permute.xlu0 %1031
        %v1034 = vmul.f32 %v1024, %v1032
        %1036 = vrot.lane.b32.xlu0 %v1034, 32
        %v1037 = vpop.permute.xlu0 %1036
        %v1039 = vadd.f32 %v1029, %v1037
        %v1040 = vtanh.pop %v1039
        %1042 = vrot.lane.b32.xlu0 %v1040, 32
        %v1043 = vpop.permute.xlu0 %1042
        %v1045 = vmul.f32 %v1024, %v1043
        %1047 = vrot.lane.b32.xlu0 %v1045, 64
        %v1048 = vpop.permute.xlu0 %1047
        %vm1050 = vcmask 256002
        %1051 = vst.msk [vmem:[#allocation2] sm:$0x4] %vm1050, %v1048
        %v1052 = vrot.slane %v1045, 2
        %1053 = vrot.lane.b32.xlu0 %v1052, 64
        %v1054 = vpop.permute.xlu0 %1053
        %v1055 = vsel %vm565, %v1054, 0
        %1057 = vmatprep.subr.mxu0 0.0
        %1058 = vmatpush1.msra.mxu0 %v723
        %1059 = vmatprep.subr.mxu0 0.0
        %1060 = vmatpush1.msra.mxu0 %v724
        %1061 = vmatprep.subr.mxu0 0.0
        %1062 = vmatpush1.msra.mxu0 %v725
        %1063 = vmatprep.subr.mxu0 0.0
        %1064 = vmatpush1.msra.mxu0 %v726
        %1065 = vmatprep.subr.mxu0 0.0
        %1066 = vmatpush1.msra.mxu0 0.0
        %1067 = vmatprep.subr.mxu0 0.0
        %1068 = vmatpush1.msra.mxu0 0.0
        %1069 = vmatprep.subr.mxu0 0.0
        %1070 = vmatpush1.msra.mxu0 0.0
        %1071 = vmatprep.subr.mxu0 0.0
        %1072 = vmatpush1.msra.mxu0 0.0
        %1073 = vmatprep.subr.mxu0 0.0
        %1074 = vmatpush1.msra.mxu0 0.0
        %1075 = vmatprep.subr.mxu0 0.0
        %1076 = vmatpush1.msra.mxu0 0.0
        %1077 = vmatprep.subr.mxu0 0.0
        %1078 = vmatpush1.msra.mxu0 0.0
        %1079 = vmatprep.subr.mxu0 0.0
        %1080 = vmatpush1.msra.mxu0 0.0
        %1081 = vmatprep.subr.mxu0 0.0
        %1082 = vmatpush1.msra.mxu0 0.0
        %1083 = vmatprep.subr.mxu0 0.0
        %1084 = vmatpush1.msra.mxu0 0.0
        %1085 = vmatprep.subr.mxu0 0.0
        %1086 = vmatpush1.msra.mxu0 0.0
        %1087 = vmatprep.subr.mxu0 0.0
        %1088 = vmatpush1.msra.mxu0 0.0
        %1089 = vmatprep.subr.mxu0 0.0
        %1090 = vmatpush1.msra.mxu0 0.0
        %1091 = vmatprep.subr.mxu0 0.0
        %1092 = vmatpush1.msra.mxu0 0.0
        %1093 = vmatprep.subr.mxu0 0.0
        %1094 = vmatpush1.msra.mxu0 0.0
        %1095 = vmatprep.subr.mxu0 0.0
        %1096 = vmatpush1.msra.mxu0 0.0
        %1097 = vmatprep.subr.mxu0 0.0
        %1098 = vmatpush1.msra.mxu0 0.0
        %1099 = vmatprep.subr.mxu0 0.0
        %1100 = vmatpush1.msra.mxu0 0.0
        %1101 = vmatprep.subr.mxu0 0.0
        %1102 = vmatpush1.msra.mxu0 0.0
        %1103 = vmatprep.subr.mxu0 0.0
        %1104 = vmatpush1.msra.mxu0 0.0
        %1105 = vmatprep.subr.mxu0 0.0
        %1106 = vmatpush1.msra.mxu0 0.0
        %1107 = vmatprep.subr.mxu0 0.0
        %1108 = vmatpush1.msra.mxu0 0.0
        %1109 = vmatprep.subr.mxu0 0.0
        %1110 = vmatpush1.msra.mxu0 0.0
        %1111 = vmatprep.subr.mxu0 0.0
        %1112 = vmatpush1.msra.mxu0 0.0
        %1113 = vmatprep.subr.mxu0 0.0
        %1114 = vmatpush1.msra.mxu0 0.0
        %1115 = vmatprep.subr.mxu0 0.0
        %1116 = vmatpush1.msra.mxu0 0.0
        %1117 = vmatprep.subr.mxu0 0.0
        %1118 = vmatpush1.msra.mxu0 0.0
        %1119 = vmatprep.subr.mxu0 0.0
        %1120 = vmatpush1.msra.mxu0 0.0
        %1121 = vmatprep.mubr.f32.mxu0 0.0
        %1122 = vmatmul.mubr.f32.gmra.mrb[0].mxu0 %v1055
        %v1123 = vpop.f32.mrb[0].mxu0
        %v1124 = vadd.f32 0.0, %v1123
        %v1125 = vpop.f32.mrb[0].mxu0
        %1126 = vdwg.mxu0
        %v1128 = vrot.slane %v1124, 5
        %v1130 = vadd.f32 %v720, %v1128
        %v1131 = vxor.u32 %v1130, 2147483648
        %v1132 = vmul.f32 %v1131, 1.442695
        %v1133 = vpow.pop %v1132
        %v1134 = vadd.f32 %v1133, 1.0
        %v1135 = vrcp.pop %v1134
        %v1136 = vmul.f32 1.0, %v1135
        %v1137 = vtanh.pop %v1130
        %v1139 = vrot.slane %v1039, 7
        %v1141 = vmul.f32 %v1136, %v1139
        %1143 = vrot.lane.b32.xlu0 %v1137, 32
        %v1144 = vpop.permute.xlu0 %1143
        %v1146 = vmul.f32 %v1136, %v1144
        %1148 = vrot.lane.b32.xlu0 %v1146, 32
        %v1149 = vpop.permute.xlu0 %1148
        %v1151 = vadd.f32 %v1141, %v1149
        %v1152 = vtanh.pop %v1151
        %1154 = vrot.lane.b32.xlu0 %v1152, 32
        %v1155 = vpop.permute.xlu0 %1154
        %v1157 = vmul.f32 %v1136, %v1155
        %1159 = vrot.lane.b32.xlu0 %v1157, 64
        %v1160 = vpop.permute.xlu0 %1159
        %vm1162 = vcmask 257027
        %1163 = vst.msk [vmem:[#allocation2] sm:$0x8] %vm1162, %v1160
        %v1164 = vrot.slane %v1157, 3
        %1165 = vrot.lane.b32.xlu0 %v1164, 64
        %v1166 = vpop.permute.xlu0 %1165
        %v1167 = vsel %vm565, %v1166, 0
        %1169 = vmatprep.subr.mxu0 0.0
        %1170 = vmatpush1.msra.mxu0 %v723
        %1171 = vmatprep.subr.mxu0 0.0
        %1172 = vmatpush1.msra.mxu0 %v724
        %1173 = vmatprep.subr.mxu0 0.0
        %1174 = vmatpush1.msra.mxu0 %v725
        %1175 = vmatprep.subr.mxu0 0.0
        %1176 = vmatpush1.msra.mxu0 %v726
        %1177 = vmatprep.subr.mxu0 0.0
        %1178 = vmatpush1.msra.mxu0 0.0
        %1179 = vmatprep.subr.mxu0 0.0
        %1180 = vmatpush1.msra.mxu0 0.0
        %1181 = vmatprep.subr.mxu0 0.0
        %1182 = vmatpush1.msra.mxu0 0.0
        %1183 = vmatprep.subr.mxu0 0.0
        %1184 = vmatpush1.msra.mxu0 0.0
        %1185 = vmatprep.subr.mxu0 0.0
        %1186 = vmatpush1.msra.mxu0 0.0
        %1187 = vmatprep.subr.mxu0 0.0
        %1188 = vmatpush1.msra.mxu0 0.0
        %1189 = vmatprep.subr.mxu0 0.0
        %1190 = vmatpush1.msra.mxu0 0.0
        %1191 = vmatprep.subr.mxu0 0.0
        %1192 = vmatpush1.msra.mxu0 0.0
        %1193 = vmatprep.subr.mxu0 0.0
        %1194 = vmatpush1.msra.mxu0 0.0
        %1195 = vmatprep.subr.mxu0 0.0
        %1196 = vmatpush1.msra.mxu0 0.0
        %1197 = vmatprep.subr.mxu0 0.0
        %1198 = vmatpush1.msra.mxu0 0.0
        %1199 = vmatprep.subr.mxu0 0.0
        %1200 = vmatpush1.msra.mxu0 0.0
        %1201 = vmatprep.subr.mxu0 0.0
        %1202 = vmatpush1.msra.mxu0 0.0
        %1203 = vmatprep.subr.mxu0 0.0
        %1204 = vmatpush1.msra.mxu0 0.0
        %1205 = vmatprep.subr.mxu0 0.0
        %1206 = vmatpush1.msra.mxu0 0.0
        %1207 = vmatprep.subr.mxu0 0.0
        %1208 = vmatpush1.msra.mxu0 0.0
        %1209 = vmatprep.subr.mxu0 0.0
        %1210 = vmatpush1.msra.mxu0 0.0
        %1211 = vmatprep.subr.mxu0 0.0
        %1212 = vmatpush1.msra.mxu0 0.0
        %1213 = vmatprep.subr.mxu0 0.0
        %1214 = vmatpush1.msra.mxu0 0.0
        %1215 = vmatprep.subr.mxu0 0.0
        %1216 = vmatpush1.msra.mxu0 0.0
        %1217 = vmatprep.subr.mxu0 0.0
        %1218 = vmatpush1.msra.mxu0 0.0
        %1219 = vmatprep.subr.mxu0 0.0
        %1220 = vmatpush1.msra.mxu0 0.0
        %1221 = vmatprep.subr.mxu0 0.0
        %1222 = vmatpush1.msra.mxu0 0.0
        %1223 = vmatprep.subr.mxu0 0.0
        %1224 = vmatpush1.msra.mxu0 0.0
        %1225 = vmatprep.subr.mxu0 0.0
        %1226 = vmatpush1.msra.mxu0 0.0
        %1227 = vmatprep.subr.mxu0 0.0
        %1228 = vmatpush1.msra.mxu0 0.0
        %1229 = vmatprep.subr.mxu0 0.0
        %1230 = vmatpush1.msra.mxu0 0.0
        %1231 = vmatprep.subr.mxu0 0.0
        %1232 = vmatpush1.msra.mxu0 0.0
        %1233 = vmatprep.mubr.f32.mxu0 0.0
        %1234 = vmatmul.mubr.f32.gmra.mrb[0].mxu0 %v1167
        %v1235 = vpop.f32.mrb[0].mxu0
        %v1236 = vadd.f32 0.0, %v1235
        %v1237 = vpop.f32.mrb[0].mxu0
        %1238 = vdwg.mxu0
        %v1240 = vrot.slane %v1236, 4
        %v1242 = vadd.f32 %v720, %v1240
        %v1243 = vxor.u32 %v1242, 2147483648
        %v1244 = vmul.f32 %v1243, 1.442695
        %v1245 = vpow.pop %v1244
        %v1246 = vadd.f32 %v1245, 1.0
        %v1247 = vrcp.pop %v1246
        %v1248 = vmul.f32 1.0, %v1247
        %v1249 = vtanh.pop %v1242
        %v1251 = vrot.slane %v1151, 7
        %v1253 = vmul.f32 %v1248, %v1251
        %1255 = vrot.lane.b32.xlu0 %v1249, 32
        %v1256 = vpop.permute.xlu0 %1255
        %v1258 = vmul.f32 %v1248, %v1256
        %1260 = vrot.lane.b32.xlu0 %v1258, 32
        %v1261 = vpop.permute.xlu0 %1260
        %v1263 = vadd.f32 %v1253, %v1261
        %v1264 = vtanh.pop %v1263
        %1266 = vrot.lane.b32.xlu0 %v1264, 32
        %v1267 = vpop.permute.xlu0 %1266
        %v1269 = vmul.f32 %v1248, %v1267
        %1271 = vrot.lane.b32.xlu0 %v1269, 64
        %v1272 = vpop.permute.xlu0 %1271
        %vm1274 = vcmask 258052
        %1275 = vst.msk [vmem:[#allocation2] sm:$0x10] %vm1274, %v1272
        %v1276 = vrot.slane %v1269, 4
        %1277 = vrot.lane.b32.xlu0 %v1276, 64
        %v1278 = vpop.permute.xlu0 %1277
        %v1279 = vsel %vm565, %v1278, 0
        %1281 = vmatprep.subr.mxu0 0.0
        %1282 = vmatpush1.msra.mxu0 %v723
        %1283 = vmatprep.subr.mxu0 0.0
        %1284 = vmatpush1.msra.mxu0 %v724
        %1285 = vmatprep.subr.mxu0 0.0
        %1286 = vmatpush1.msra.mxu0 %v725
        %1287 = vmatprep.subr.mxu0 0.0
        %1288 = vmatpush1.msra.mxu0 %v726
        %1289 = vmatprep.subr.mxu0 0.0
        %1290 = vmatpush1.msra.mxu0 0.0
        %1291 = vmatprep.subr.mxu0 0.0
        %1292 = vmatpush1.msra.mxu0 0.0
        %1293 = vmatprep.subr.mxu0 0.0
        %1294 = vmatpush1.msra.mxu0 0.0
        %1295 = vmatprep.subr.mxu0 0.0
        %1296 = vmatpush1.msra.mxu0 0.0
        %1297 = vmatprep.subr.mxu0 0.0
        %1298 = vmatpush1.msra.mxu0 0.0
        %1299 = vmatprep.subr.mxu0 0.0
        %1300 = vmatpush1.msra.mxu0 0.0
        %1301 = vmatprep.subr.mxu0 0.0
        %1302 = vmatpush1.msra.mxu0 0.0
        %1303 = vmatprep.subr.mxu0 0.0
        %1304 = vmatpush1.msra.mxu0 0.0
        %1305 = vmatprep.subr.mxu0 0.0
        %1306 = vmatpush1.msra.mxu0 0.0
        %1307 = vmatprep.subr.mxu0 0.0
        %1308 = vmatpush1.msra.mxu0 0.0
        %1309 = vmatprep.subr.mxu0 0.0
        %1310 = vmatpush1.msra.mxu0 0.0
        %1311 = vmatprep.subr.mxu0 0.0
        %1312 = vmatpush1.msra.mxu0 0.0
        %1313 = vmatprep.subr.mxu0 0.0
        %1314 = vmatpush1.msra.mxu0 0.0
        %1315 = vmatprep.subr.mxu0 0.0
        %1316 = vmatpush1.msra.mxu0 0.0
        %1317 = vmatprep.subr.mxu0 0.0
        %1318 = vmatpush1.msra.mxu0 0.0
        %1319 = vmatprep.subr.mxu0 0.0
        %1320 = vmatpush1.msra.mxu0 0.0
        %1321 = vmatprep.subr.mxu0 0.0
        %1322 = vmatpush1.msra.mxu0 0.0
        %1323 = vmatprep.subr.mxu0 0.0
        %1324 = vmatpush1.msra.mxu0 0.0
        %1325 = vmatprep.subr.mxu0 0.0
        %1326 = vmatpush1.msra.mxu0 0.0
        %1327 = vmatprep.subr.mxu0 0.0
        %1328 = vmatpush1.msra.mxu0 0.0
        %1329 = vmatprep.subr.mxu0 0.0
        %1330 = vmatpush1.msra.mxu0 0.0
        %1331 = vmatprep.subr.mxu0 0.0
        %1332 = vmatpush1.msra.mxu0 0.0
        %1333 = vmatprep.subr.mxu0 0.0
        %1334 = vmatpush1.msra.mxu0 0.0
        %1335 = vmatprep.subr.mxu0 0.0
        %1336 = vmatpush1.msra.mxu0 0.0
        %1337 = vmatprep.subr.mxu0 0.0
        %1338 = vmatpush1.msra.mxu0 0.0
        %1339 = vmatprep.subr.mxu0 0.0
        %1340 = vmatpush1.msra.mxu0 0.0
        %1341 = vmatprep.subr.mxu0 0.0
        %1342 = vmatpush1.msra.mxu0 0.0
        %1343 = vmatprep.subr.mxu0 0.0
        %1344 = vmatpush1.msra.mxu0 0.0
        %1345 = vmatprep.mubr.f32.mxu0 0.0
        %1346 = vmatmul.mubr.f32.gmra.mrb[0].mxu0 %v1279
        %v1347 = vpop.f32.mrb[0].mxu0
        %v1348 = vadd.f32 0.0, %v1347
        %v1349 = vpop.f32.mrb[0].mxu0
        %1350 = vdwg.mxu0
        %v1352 = vrot.slane %v1348, 3
        %v1354 = vadd.f32 %v720, %v1352
        %v1355 = vxor.u32 %v1354, 2147483648
        %v1356 = vmul.f32 %v1355, 1.442695
        %v1357 = vpow.pop %v1356
        %v1358 = vadd.f32 %v1357, 1.0
        %v1359 = vrcp.pop %v1358
        %v1360 = vmul.f32 1.0, %v1359
        %v1361 = vtanh.pop %v1354
        %v1363 = vrot.slane %v1263, 7
        %v1365 = vmul.f32 %v1360, %v1363
        %1367 = vrot.lane.b32.xlu0 %v1361, 32
        %v1368 = vpop.permute.xlu0 %1367
        %v1370 = vmul.f32 %v1360, %v1368
        %1372 = vrot.lane.b32.xlu0 %v1370, 32
        %v1373 = vpop.permute.xlu0 %1372
        %v1375 = vadd.f32 %v1365, %v1373
        %v1376 = vtanh.pop %v1375
        %1378 = vrot.lane.b32.xlu0 %v1376, 32
        %v1379 = vpop.permute.xlu0 %1378
        %v1381 = vmul.f32 %v1360, %v1379
        %1383 = vrot.lane.b32.xlu0 %v1381, 64
        %v1384 = vpop.permute.xlu0 %1383
        %vm1386 = vcmask 259077
        %1387 = vst.msk [vmem:[#allocation2] sm:$0x20] %vm1386, %v1384
        %v1388 = vrot.slane %v1381, 5
        %1389 = vrot.lane.b32.xlu0 %v1388, 64
        %v1390 = vpop.permute.xlu0 %1389
        %v1391 = vsel %vm565, %v1390, 0
        %1393 = vmatprep.subr.mxu0 0.0
        %1394 = vmatpush1.msra.mxu0 %v723
        %1395 = vmatprep.subr.mxu0 0.0
        %1396 = vmatpush1.msra.mxu0 %v724
        %1397 = vmatprep.subr.mxu0 0.0
        %1398 = vmatpush1.msra.mxu0 %v725
        %1399 = vmatprep.subr.mxu0 0.0
        %1400 = vmatpush1.msra.mxu0 %v726
        %1401 = vmatprep.subr.mxu0 0.0
        %1402 = vmatpush1.msra.mxu0 0.0
        %1403 = vmatprep.subr.mxu0 0.0
        %1404 = vmatpush1.msra.mxu0 0.0
        %1405 = vmatprep.subr.mxu0 0.0
        %1406 = vmatpush1.msra.mxu0 0.0
        %1407 = vmatprep.subr.mxu0 0.0
        %1408 = vmatpush1.msra.mxu0 0.0
        %1409 = vmatprep.subr.mxu0 0.0
        %1410 = vmatpush1.msra.mxu0 0.0
        %1411 = vmatprep.subr.mxu0 0.0
        %1412 = vmatpush1.msra.mxu0 0.0
        %1413 = vmatprep.subr.mxu0 0.0
        %1414 = vmatpush1.msra.mxu0 0.0
        %1415 = vmatprep.subr.mxu0 0.0
        %1416 = vmatpush1.msra.mxu0 0.0
        %1417 = vmatprep.subr.mxu0 0.0
        %1418 = vmatpush1.msra.mxu0 0.0
        %1419 = vmatprep.subr.mxu0 0.0
        %1420 = vmatpush1.msra.mxu0 0.0
        %1421 = vmatprep.subr.mxu0 0.0
        %1422 = vmatpush1.msra.mxu0 0.0
        %1423 = vmatprep.subr.mxu0 0.0
        %1424 = vmatpush1.msra.mxu0 0.0
        %1425 = vmatprep.subr.mxu0 0.0
        %1426 = vmatpush1.msra.mxu0 0.0
        %1427 = vmatprep.subr.mxu0 0.0
        %1428 = vmatpush1.msra.mxu0 0.0
        %1429 = vmatprep.subr.mxu0 0.0
        %1430 = vmatpush1.msra.mxu0 0.0
        %1431 = vmatprep.subr.mxu0 0.0
        %1432 = vmatpush1.msra.mxu0 0.0
        %1433 = vmatprep.subr.mxu0 0.0
        %1434 = vmatpush1.msra.mxu0 0.0
        %1435 = vmatprep.subr.mxu0 0.0
        %1436 = vmatpush1.msra.mxu0 0.0
        %1437 = vmatprep.subr.mxu0 0.0
        %1438 = vmatpush1.msra.mxu0 0.0
        %1439 = vmatprep.subr.mxu0 0.0
        %1440 = vmatpush1.msra.mxu0 0.0
        %1441 = vmatprep.subr.mxu0 0.0
        %1442 = vmatpush1.msra.mxu0 0.0
        %1443 = vmatprep.subr.mxu0 0.0
        %1444 = vmatpush1.msra.mxu0 0.0
        %1445 = vmatprep.subr.mxu0 0.0
        %1446 = vmatpush1.msra.mxu0 0.0
        %1447 = vmatprep.subr.mxu0 0.0
        %1448 = vmatpush1.msra.mxu0 0.0
        %1449 = vmatprep.subr.mxu0 0.0
        %1450 = vmatpush1.msra.mxu0 0.0
        %1451 = vmatprep.subr.mxu0 0.0
        %1452 = vmatpush1.msra.mxu0 0.0
        %1453 = vmatprep.subr.mxu0 0.0
        %1454 = vmatpush1.msra.mxu0 0.0
        %1455 = vmatprep.subr.mxu0 0.0
        %1456 = vmatpush1.msra.mxu0 0.0
        %1457 = vmatprep.mubr.f32.mxu0 0.0
        %1458 = vmatmul.mubr.f32.gmra.mrb[0].mxu0 %v1391
        %v1459 = vpop.f32.mrb[0].mxu0
        %v1460 = vadd.f32 0.0, %v1459
        %v1461 = vpop.f32.mrb[0].mxu0
        %1462 = vdwg.mxu0
        %v1464 = vrot.slane %v1460, 2
        %v1466 = vadd.f32 %v720, %v1464
        %v1467 = vxor.u32 %v1466, 2147483648
        %v1468 = vmul.f32 %v1467, 1.442695
        %v1469 = vpow.pop %v1468
        %v1470 = vadd.f32 %v1469, 1.0
        %v1471 = vrcp.pop %v1470
        %v1472 = vmul.f32 1.0, %v1471
        %v1473 = vtanh.pop %v1466
        %v1475 = vrot.slane %v1375, 7
        %v1477 = vmul.f32 %v1472, %v1475
        %1479 = vrot.lane.b32.xlu0 %v1473, 32
        %v1480 = vpop.permute.xlu0 %1479
        %v1482 = vmul.f32 %v1472, %v1480
        %1484 = vrot.lane.b32.xlu0 %v1482, 32
        %v1485 = vpop.permute.xlu0 %1484
        %v1487 = vadd.f32 %v1477, %v1485
        %v1488 = vtanh.pop %v1487
        %1490 = vrot.lane.b32.xlu0 %v1488, 32
        %v1491 = vpop.permute.xlu0 %1490
        %v1493 = vmul.f32 %v1472, %v1491
        %1495 = vrot.lane.b32.xlu0 %v1493, 64
        %v1496 = vpop.permute.xlu0 %1495
        %vm1498 = vcmask 260102
        %1499 = vst.msk [vmem:[#allocation2] sm:$0x40] %vm1498, %v1496
        %v1500 = vrot.slane %v1493, 6
        %1501 = vrot.lane.b32.xlu0 %v1500, 64
        %v1502 = vpop.permute.xlu0 %1501
        %v1503 = vsel %vm565, %v1502, 0
        %1505 = vmatprep.subr.mxu0 0.0
        %1506 = vmatpush1.msra.mxu0 %v723
        %1507 = vmatprep.subr.mxu0 0.0
        %1508 = vmatpush1.msra.mxu0 %v724
        %1509 = vmatprep.subr.mxu0 0.0
        %1510 = vmatpush1.msra.mxu0 %v725
        %1511 = vmatprep.subr.mxu0 0.0
        %1512 = vmatpush1.msra.mxu0 %v726
        %1513 = vmatprep.subr.mxu0 0.0
        %1514 = vmatpush1.msra.mxu0 0.0
        %1515 = vmatprep.subr.mxu0 0.0
        %1516 = vmatpush1.msra.mxu0 0.0
        %1517 = vmatprep.subr.mxu0 0.0
        %1518 = vmatpush1.msra.mxu0 0.0
        %1519 = vmatprep.subr.mxu0 0.0
        %1520 = vmatpush1.msra.mxu0 0.0
        %1521 = vmatprep.subr.mxu0 0.0
        %1522 = vmatpush1.msra.mxu0 0.0
        %1523 = vmatprep.subr.mxu0 0.0
        %1524 = vmatpush1.msra.mxu0 0.0
        %1525 = vmatprep.subr.mxu0 0.0
        %1526 = vmatpush1.msra.mxu0 0.0
        %1527 = vmatprep.subr.mxu0 0.0
        %1528 = vmatpush1.msra.mxu0 0.0
        %1529 = vmatprep.subr.mxu0 0.0
        %1530 = vmatpush1.msra.mxu0 0.0
        %1531 = vmatprep.subr.mxu0 0.0
        %1532 = vmatpush1.msra.mxu0 0.0
        %1533 = vmatprep.subr.mxu0 0.0
        %1534 = vmatpush1.msra.mxu0 0.0
        %1535 = vmatprep.subr.mxu0 0.0
        %1536 = vmatpush1.msra.mxu0 0.0
        %1537 = vmatprep.subr.mxu0 0.0
        %1538 = vmatpush1.msra.mxu0 0.0
        %1539 = vmatprep.subr.mxu0 0.0
        %1540 = vmatpush1.msra.mxu0 0.0
        %1541 = vmatprep.subr.mxu0 0.0
        %1542 = vmatpush1.msra.mxu0 0.0
        %1543 = vmatprep.subr.mxu0 0.0
        %1544 = vmatpush1.msra.mxu0 0.0
        %1545 = vmatprep.subr.mxu0 0.0
        %1546 = vmatpush1.msra.mxu0 0.0
        %1547 = vmatprep.subr.mxu0 0.0
        %1548 = vmatpush1.msra.mxu0 0.0
        %1549 = vmatprep.subr.mxu0 0.0
        %1550 = vmatpush1.msra.mxu0 0.0
        %1551 = vmatprep.subr.mxu0 0.0
        %1552 = vmatpush1.msra.mxu0 0.0
        %1553 = vmatprep.subr.mxu0 0.0
        %1554 = vmatpush1.msra.mxu0 0.0
        %1555 = vmatprep.subr.mxu0 0.0
        %1556 = vmatpush1.msra.mxu0 0.0
        %1557 = vmatprep.subr.mxu0 0.0
        %1558 = vmatpush1.msra.mxu0 0.0
        %1559 = vmatprep.subr.mxu0 0.0
        %1560 = vmatpush1.msra.mxu0 0.0
        %1561 = vmatprep.subr.mxu0 0.0
        %1562 = vmatpush1.msra.mxu0 0.0
        %1563 = vmatprep.subr.mxu0 0.0
        %1564 = vmatpush1.msra.mxu0 0.0
        %1565 = vmatprep.subr.mxu0 0.0
        %1566 = vmatpush1.msra.mxu0 0.0
        %1567 = vmatprep.subr.mxu0 0.0
        %1568 = vmatpush1.msra.mxu0 0.0
        %1569 = vmatprep.mubr.f32.mxu0 0.0
        %1570 = vmatmul.mubr.f32.gmra.mrb[0].mxu0 %v1503
        %v1571 = vpop.f32.mrb[0].mxu0
        %v1572 = vadd.f32 0.0, %v1571
        %v1573 = vpop.f32.mrb[0].mxu0
        %1574 = vdwg.mxu0
        %v1576 = vrot.slane %v1572, 1
        %v1578 = vadd.f32 %v720, %v1576
        %v1579 = vxor.u32 %v1578, 2147483648
        %v1580 = vmul.f32 %v1579, 1.442695
        %v1581 = vpow.pop %v1580
        %v1582 = vadd.f32 %v1581, 1.0
        %v1583 = vrcp.pop %v1582
        %v1584 = vmul.f32 1.0, %v1583
        %v1585 = vtanh.pop %v1578
        %v1587 = vrot.slane %v1487, 7
        %v1589 = vmul.f32 %v1584, %v1587
        %1591 = vrot.lane.b32.xlu0 %v1585, 32
        %v1592 = vpop.permute.xlu0 %1591
        %v1594 = vmul.f32 %v1584, %v1592
        %1596 = vrot.lane.b32.xlu0 %v1594, 32
        %v1597 = vpop.permute.xlu0 %1596
        %v1599 = vadd.f32 %v1589, %v1597
        %v1600 = vtanh.pop %v1599
        %1602 = vrot.lane.b32.xlu0 %v1600, 32
        %v1603 = vpop.permute.xlu0 %1602
        %v1605 = vmul.f32 %v1584, %v1603
        %1607 = vrot.lane.b32.xlu0 %v1605, 64
        %v1608 = vpop.permute.xlu0 %1607
        %vm1610 = vcmask 261127
        %1611 = vst.msk [vmem:[#allocation2] sm:$0x80] %vm1610, %v1608
        %v1612 = vld [vmem:[#allocation2] sm:$0xff]
        %v1613 = vld [vmem:[%s8] sm:$0xff]
        %v1614 = vld [vmem:[%s8 + $0x8] sm:$0xff]
        %v1615 = vld [vmem:[%s8 + $0x10] sm:$0xff]
        %v1616 = vld [vmem:[%s8 + $0x18] sm:$0xff]
        %v1618 = vsel %vm565, %v1612, 0
        %1620 = vmatprep.subr.mxu0 0.0
        %1621 = vmatpush1.msra.mxu0 %v1613
        %1622 = vmatprep.subr.mxu0 0.0
        %1623 = vmatpush1.msra.mxu0 %v1614
        %1624 = vmatprep.subr.mxu0 0.0
        %1625 = vmatpush1.msra.mxu0 %v1615
        %1626 = vmatprep.subr.mxu0 0.0
        %1627 = vmatpush1.msra.mxu0 %v1616
        %1628 = vmatprep.subr.mxu0 0.0
        %1629 = vmatpush1.msra.mxu0 0.0
        %1630 = vmatprep.subr.mxu0 0.0
        %1631 = vmatpush1.msra.mxu0 0.0
        %1632 = vmatprep.subr.mxu0 0.0
        %1633 = vmatpush1.msra.mxu0 0.0
        %1634 = vmatprep.subr.mxu0 0.0
        %1635 = vmatpush1.msra.mxu0 0.0
        %1636 = vmatprep.subr.mxu0 0.0
        %1637 = vmatpush1.msra.mxu0 0.0
        %1638 = vmatprep.subr.mxu0 0.0
        %1639 = vmatpush1.msra.mxu0 0.0
        %1640 = vmatprep.subr.mxu0 0.0
        %1641 = vmatpush1.msra.mxu0 0.0
        %1642 = vmatprep.subr.mxu0 0.0
        %1643 = vmatpush1.msra.mxu0 0.0
        %1644 = vmatprep.subr.mxu0 0.0
        %1645 = vmatpush1.msra.mxu0 0.0
        %1646 = vmatprep.subr.mxu0 0.0
        %1647 = vmatpush1.msra.mxu0 0.0
        %1648 = vmatprep.subr.mxu0 0.0
        %1649 = vmatpush1.msra.mxu0 0.0
        %1650 = vmatprep.subr.mxu0 0.0
        %1651 = vmatpush1.msra.mxu0 0.0
        %1652 = vmatprep.subr.mxu0 0.0
        %1653 = vmatpush1.msra.mxu0 0.0
        %1654 = vmatprep.subr.mxu0 0.0
        %1655 = vmatpush1.msra.mxu0 0.0
        %1656 = vmatprep.subr.mxu0 0.0
        %1657 = vmatpush1.msra.mxu0 0.0
        %1658 = vmatprep.subr.mxu0 0.0
        %1659 = vmatpush1.msra.mxu0 0.0
        %1660 = vmatprep.subr.mxu0 0.0
        %1661 = vmatpush1.msra.mxu0 0.0
        %1662 = vmatprep.subr.mxu0 0.0
        %1663 = vmatpush1.msra.mxu0 0.0
        %1664 = vmatprep.subr.mxu0 0.0
        %1665 = vmatpush1.msra.mxu0 0.0
        %1666 = vmatprep.subr.mxu0 0.0
        %1667 = vmatpush1.msra.mxu0 0.0
        %1668 = vmatprep.subr.mxu0 0.0
        %1669 = vmatpush1.msra.mxu0 0.0
        %1670 = vmatprep.subr.mxu0 0.0
        %1671 = vmatpush1.msra.mxu0 0.0
        %1672 = vmatprep.subr.mxu0 0.0
        %1673 = vmatpush1.msra.mxu0 0.0
        %1674 = vmatprep.subr.mxu0 0.0
        %1675 = vmatpush1.msra.mxu0 0.0
        %1676 = vmatprep.subr.mxu0 0.0
        %1677 = vmatpush1.msra.mxu0 0.0
        %1678 = vmatprep.subr.mxu0 0.0
        %1679 = vmatpush1.msra.mxu0 0.0
        %1680 = vmatprep.subr.mxu0 0.0
        %1681 = vmatpush1.msra.mxu0 0.0
        %1682 = vmatprep.subr.mxu0 0.0
        %1683 = vmatpush1.msra.mxu0 0.0
        %1684 = vmatprep.mubr.f32.mxu0 0.0
        %1685 = vmatmul.mubr.f32.gmra.mrb[0].mxu0 %v1618
        %v1686 = vpop.f32.mrb[0].mxu0
        %v1687 = vadd.f32 0.0, %v1686
        %v1688 = vpop.f32.mrb[0].mxu0
        %1689 = vdwg.mxu0
        %v1690 = vtanh.pop %v1687
        %vm1691 = vcmask 7168
        %v1692 = vsel %vm1691, %v1690, -inf
        %v1693 = vrot.slane %v1692, 4
        %v1694 = vmax.f32 %v1692, %v1693
        %v1695 = vrot.slane %v1694, 2
        %v1696 = vmax.f32 %v1694, %v1695
        %v1697 = vrot.slane %v1696, 1
        %v1698 = vmax.f32 %v1696, %v1697
        %v1699 = vsub.f32 %v1690, %v1698
        %v1700 = vmul.f32 %v1699, 1.442695
        %v1701 = vpow.pop %v1700
        %v1702 = vsel %vm1691, %v1701, 0.0
        %v1703 = vrot.slane %v1702, 4
        %v1704 = vadd.f32 %v1702, %v1703
        %v1705 = vrot.slane %v1704, 2
        %v1706 = vadd.f32 %v1704, %v1705
        %v1707 = vrot.slane %v1706, 1
        %v1708 = vadd.f32 %v1706, %v1707
        %v1709 = vrcp.pop %v1708
        %v1710 = vmul.f32 %v1701, %v1709
        %1712 = vset.pattern.permute.xlu0 0
        %1713 = vperm.xlu0 %1712, %v1710
        %v1714 = vpop.permute.xlu0 %1713
        %v1716 = vmul.f32 %v1714, %v1612
        %v1717 = vsel %vm565, %v1716, 0.0
        %v1718 = vrot.slane %v1717, 4
        %v1719 = vadd.f32 %v1717, %v1718
        %v1720 = vrot.slane %v1719, 2
        %v1721 = vadd.f32 %v1719, %v1720
        %v1722 = vrot.slane %v1721, 1
        %v1723 = vadd.f32 %v1721, %v1722
        %v1724 = vld [vmem:[#allocation6] sm:$0xff]
        %v1725 = vld [vmem:[#allocation6 + $0x8] sm:$0xff]
        %v1726 = vld [vmem:[#allocation6 + $0x10] sm:$0xff]
        %v1727 = vld [vmem:[#allocation6 + $0x18] sm:$0xff]
        %v1728 = vld [vmem:[%s10] sm:$0x1]
        %v1730 = vsel %vm565, %v1723, 0
        %1732 = vmatprep.subr.mxu0 0.0
        %1733 = vmatpush1.msra.mxu0 %v1724
        %1734 = vmatprep.subr.mxu0 0.0
        %1735 = vmatpush1.msra.mxu0 %v1725
        %1736 = vmatprep.subr.mxu0 0.0
        %1737 = vmatpush1.msra.mxu0 %v1726
        %1738 = vmatprep.subr.mxu0 0.0
        %1739 = vmatpush1.msra.mxu0 %v1727
        %1740 = vmatprep.subr.mxu0 0.0
        %1741 = vmatpush1.msra.mxu0 0.0
        %1742 = vmatprep.subr.mxu0 0.0
        %1743 = vmatpush1.msra.mxu0 0.0
        %1744 = vmatprep.subr.mxu0 0.0
        %1745 = vmatpush1.msra.mxu0 0.0
        %1746 = vmatprep.subr.mxu0 0.0
        %1747 = vmatpush1.msra.mxu0 0.0
        %1748 = vmatprep.subr.mxu0 0.0
        %1749 = vmatpush1.msra.mxu0 0.0
        %1750 = vmatprep.subr.mxu0 0.0
        %1751 = vmatpush1.msra.mxu0 0.0
        %1752 = vmatprep.subr.mxu0 0.0
        %1753 = vmatpush1.msra.mxu0 0.0
        %1754 = vmatprep.subr.mxu0 0.0
        %1755 = vmatpush1.msra.mxu0 0.0
        %1756 = vmatprep.subr.mxu0 0.0
        %1757 = vmatpush1.msra.mxu0 0.0
        %1758 = vmatprep.subr.mxu0 0.0
        %1759 = vmatpush1.msra.mxu0 0.0
        %1760 = vmatprep.subr.mxu0 0.0
        %1761 = vmatpush1.msra.mxu0 0.0
        %1762 = vmatprep.subr.mxu0 0.0
        %1763 = vmatpush1.msra.mxu0 0.0
        %1764 = vmatprep.subr.mxu0 0.0
        %1765 = vmatpush1.msra.mxu0 0.0
        %1766 = vmatprep.subr.mxu0 0.0
        %1767 = vmatpush1.msra.mxu0 0.0
        %1768 = vmatprep.subr.mxu0 0.0
        %1769 = vmatpush1.msra.mxu0 0.0
        %1770 = vmatprep.subr.mxu0 0.0
        %1771 = vmatpush1.msra.mxu0 0.0
        %1772 = vmatprep.subr.mxu0 0.0
        %1773 = vmatpush1.msra.mxu0 0.0
        %1774 = vmatprep.subr.mxu0 0.0
        %1775 = vmatpush1.msra.mxu0 0.0
        %1776 = vmatprep.subr.mxu0 0.0
        %1777 = vmatpush1.msra.mxu0 0.0
        %1778 = vmatprep.subr.mxu0 0.0
        %1779 = vmatpush1.msra.mxu0 0.0
        %1780 = vmatprep.subr.mxu0 0.0
        %1781 = vmatpush1.msra.mxu0 0.0
        %1782 = vmatprep.subr.mxu0 0.0
        %1783 = vmatpush1.msra.mxu0 0.0
        %1784 = vmatprep.subr.mxu0 0.0
        %1785 = vmatpush1.msra.mxu0 0.0
        %1786 = vmatprep.subr.mxu0 0.0
        %1787 = vmatpush1.msra.mxu0 0.0
        %1788 = vmatprep.subr.mxu0 0.0
        %1789 = vmatpush1.msra.mxu0 0.0
        %1790 = vmatprep.subr.mxu0 0.0
        %1791 = vmatpush1.msra.mxu0 0.0
        %1792 = vmatprep.subr.mxu0 0.0
        %1793 = vmatpush1.msra.mxu0 0.0
        %1794 = vmatprep.subr.mxu0 0.0
        %1795 = vmatpush1.msra.mxu0 0.0
        %1796 = vmatprep.mubr.f32.mxu0 0.0
        %1797 = vmatmul.mubr.f32.gmra.mrb[0].mxu0 %v1730
        %v1798 = vpop.f32.mrb[0].mxu0
        %v1799 = vadd.f32 %v1728, %v1798
        %v1800 = vpop.f32.mrb[0].mxu0
        %1801 = vdwg.mxu0
        %v1802 = vmax.f32 %v1799, 0.0
        %v1803 = vld [vmem:[%s11] sm:$0xff]
        %v1804 = vld [vmem:[%s11 + $0x8] sm:$0xff]
        %v1805 = vld [vmem:[%s11 + $0x10] sm:$0xff]
        %v1806 = vld [vmem:[%s11 + $0x18] sm:$0xff]
        %v1807 = vld [vmem:[#allocation3] sm:$0x1]
        %v1809 = vsel %vm565, %v1802, 0
        %1811 = vmatprep.subr.mxu0 0.0
        %1812 = vmatpush1.msra.mxu0 %v1803
        %1813 = vmatprep.subr.mxu0 0.0
        %1814 = vmatpush1.msra.mxu0 %v1804
        %1815 = vmatprep.subr.mxu0 0.0
        %1816 = vmatpush1.msra.mxu0 %v1805
        %1817 = vmatprep.subr.mxu0 0.0
        %1818 = vmatpush1.msra.mxu0 %v1806
        %1819 = vmatprep.subr.mxu0 0.0
        %1820 = vmatpush1.msra.mxu0 0.0
        %1821 = vmatprep.subr.mxu0 0.0
        %1822 = vmatpush1.msra.mxu0 0.0
        %1823 = vmatprep.subr.mxu0 0.0
        %1824 = vmatpush1.msra.mxu0 0.0
        %1825 = vmatprep.subr.mxu0 0.0
        %1826 = vmatpush1.msra.mxu0 0.0
        %1827 = vmatprep.subr.mxu0 0.0
        %1828 = vmatpush1.msra.mxu0 0.0
        %1829 = vmatprep.subr.mxu0 0.0
        %1830 = vmatpush1.msra.mxu0 0.0
        %1831 = vmatprep.subr.mxu0 0.0
        %1832 = vmatpush1.msra.mxu0 0.0
        %1833 = vmatprep.subr.mxu0 0.0
        %1834 = vmatpush1.msra.mxu0 0.0
        %1835 = vmatprep.subr.mxu0 0.0
        %1836 = vmatpush1.msra.mxu0 0.0
        %1837 = vmatprep.subr.mxu0 0.0
        %1838 = vmatpush1.msra.mxu0 0.0
        %1839 = vmatprep.subr.mxu0 0.0
        %1840 = vmatpush1.msra.mxu0 0.0
        %1841 = vmatprep.subr.mxu0 0.0
        %1842 = vmatpush1.msra.mxu0 0.0
        %1843 = vmatprep.subr.mxu0 0.0
        %1844 = vmatpush1.msra.mxu0 0.0
        %1845 = vmatprep.subr.mxu0 0.0
        %1846 = vmatpush1.msra.mxu0 0.0
        %1847 = vmatprep.subr.mxu0 0.0
        %1848 = vmatpush1.msra.mxu0 0.0
        %1849 = vmatprep.subr.mxu0 0.0
        %1850 = vmatpush1.msra.mxu0 0.0
        %1851 = vmatprep.subr.mxu0 0.0
        %1852 = vmatpush1.msra.mxu0 0.0
        %1853 = vmatprep.subr.mxu0 0.0
        %1854 = vmatpush1.msra.mxu0 0.0
        %1855 = vmatprep.subr.mxu0 0.0
        %1856 = vmatpush1.msra.mxu0 0.0
        %1857 = vmatprep.subr.mxu0 0.0
        %1858 = vmatpush1.msra.mxu0 0.0
        %1859 = vmatprep.subr.mxu0 0.0
        %1860 = vmatpush1.msra.mxu0 0.0
        %1861 = vmatprep.subr.mxu0 0.0
        %1862 = vmatpush1.msra.mxu0 0.0
        %1863 = vmatprep.subr.mxu0 0.0
        %1864 = vmatpush1.msra.mxu0 0.0
        %1865 = vmatprep.subr.mxu0 0.0
        %1866 = vmatpush1.msra.mxu0 0.0
        %1867 = vmatprep.subr.mxu0 0.0
        %1868 = vmatpush1.msra.mxu0 0.0
        %1869 = vmatprep.subr.mxu0 0.0
        %1870 = vmatpush1.msra.mxu0 0.0
        %1871 = vmatprep.subr.mxu0 0.0
        %1872 = vmatpush1.msra.mxu0 0.0
        %1873 = vmatprep.subr.mxu0 0.0
        %1874 = vmatpush1.msra.mxu0 0.0
        %1875 = vmatprep.mubr.f32.mxu0 0.0
        %1876 = vmatmul.mubr.f32.gmra.mrb[0].mxu0 %v1809
        %v1877 = vpop.f32.mrb[0].mxu0
        %v1878 = vadd.f32 %v1807, %v1877
        %v1879 = vpop.f32.mrb[0].mxu0
        %1880 = vdwg.mxu0
        %vm1881 = vcmask 0
        %1882 = vst.msk [vmem:[%s463] sm:$0x1] %vm1881, %v1878
        %p1883 = scmp.lt.s32.totalorder %s28, 1
        %s1884 = scalar_select %p1883, %s28, 1
        %s1885 = scalar_lea.vmem %s13, %s1884
        // Predicated region
        $region81: #{tpu_custom_call.1} parent=71 // pred_check
          %p1886 = pneg %p324
        $region82: #{tpu_custom_call.1} parent=71 // pred_check_branch
          %1888 = sbr.rel (%p1886) target = $region84
        $region83: #{tpu_custom_call.1} parent=71 // pred_region
          _
        $region84: #{tpu_custom_call.1} parent=71 // pred_fallthru
          _
      $region72: #{tpu_custom_call.1} parent=5 // pred_fallthru
        _
      %p1889 = scmp.le.s32.totalorder 2, %s23
      // Predicated region
      $region85: #{tpu_custom_call.1} parent=5 // pred_check
        %p1890 = pneg %p1889
      $region86: #{tpu_custom_call.1} parent=5 // pred_check_branch
        %1892 = sbr.rel (%p1890) target = $region88
      $region87: #{tpu_custom_call.1} parent=5 // pred_region
        %s1893 = ssub.s32 %s23, 2
        // Predicated region
        $region89: #{tpu_custom_call.1} parent=87 // pred_check
          %p1894 = pneg %p330
        $region90: #{tpu_custom_call.1} parent=87 // pred_check_branch
          %1896 = sbr.rel (%p1894) target = $region92
        $region91: #{tpu_custom_call.1} parent=87 // pred_region
          %p1897 = scmp.lt.s32.totalorder %s29, 1
          %s1898 = scalar_select %p1897, %s29, 1
          %s1899 = scalar_lea.vmem %s13, %s1898
        $region92: #{tpu_custom_call.1} parent=87 // pred_fallthru
          _
      $region88: #{tpu_custom_call.1} parent=5 // pred_fallthru
        _
    $region6: #{tpu_custom_call.1} parent=1 // loop_footer
      %s27 = sadd.s32 1, %s23
    $region7: #{tpu_custom_call.1} parent=1 // loop_footer_branch
      %22 = sbr.rel target = $region3
    $region8: #{tpu_custom_call.1} parent=1 // loop_exit
      _
    %1900 = vsyncpa [#allocation5], 1
    %s1901 = scalar_lea.sflag [#allocation5], 1
    %1902 = vsyncpa %s1901, 1
    %1903 = vsyncpa [#allocation7], 1

</llo_original>
